<compile_context>
chip_gen: v5e
topology: v5e:2x2
jax: 0.10.0
libtpu: 0.0.40
codegen_flags: <defaults>
</compile_context>

<pallas_src>
import numpy as np
import jax
import jax.numpy as jnp
from jax.experimental import pallas as pl
from jax.experimental.pallas import tpu as pltpu  # noqa: F401  (TPU backend)

EMBED = 32     # embed_size
HIDDEN = 32    # hidden_size
VOCAB = 40     # vocab_size
LAYERS = 2     # num_layers (dropout between layers is identity in eval)
VPAD = 128     # lane-dense padded vocab width for the in-kernel FC
SUBLANE = 8


# ---------------------------------------------------------------------------
# Pallas kernel: whole 2-layer LSTM recurrence + batched final Linear.
# ---------------------------------------------------------------------------
def _make_decoder_kernel(T, B):
    H = HIDDEN

    def kernel(x_ref,        # (T*B, E)   time-major, batch padded to B
               wih0_ref,     # (E, 4H)
               whh0_ref,     # (H, 4H)
               b0_ref,       # (1, 4H)    b_ih0 + b_hh0
               w1_ref,       # (2H, 4H)   [Wih1 ; Whh1] stacked
               b1_ref,       # (1, 4H)    b_ih1 + b_hh1
               wfc_ref,      # (H, VPAD)  fc weight, zero-padded along vocab
               bfc_ref,      # (1, VPAD)
               out_ref):     # (T*B, VPAD)
        # ---- prologue: layer-0 input projection for ALL timesteps at once ---
        xproj = (jnp.dot(x_ref[...], wih0_ref[...],
                         preferred_element_type=jnp.float32) + b0_ref[...])

        whh0 = whh0_ref[...]
        w1 = w1_ref[...]
        b1 = b1_ref[...]

        def gates_to_hc(gates, c_prev):
            # PyTorch gate order: i, f, g, o
            i = jax.nn.sigmoid(gates[:, 0 * H:1 * H])
            f = jax.nn.sigmoid(gates[:, 1 * H:2 * H])
            g = jnp.tanh(gates[:, 2 * H:3 * H])
            o = jax.nn.sigmoid(gates[:, 3 * H:4 * H])
            c_new = f * c_prev + i * g
            h_new = o * jnp.tanh(c_new)
            return h_new, c_new

        zeros = jnp.zeros((B, H), jnp.float32)
        h0, c0, h1, c1 = zeros, zeros, zeros, zeros
        h1_steps = []
        # Fully unrolled static time loop (T is small and static).  B is a
        # multiple of 8, so each xproj slice is sublane-tile aligned.
        for t in range(T):
            gates0 = xproj[t * B:(t + 1) * B, :] + jnp.dot(
                h0, whh0, preferred_element_type=jnp.float32)
            h0, c0 = gates_to_hc(gates0, c0)
            gates1 = jnp.dot(jnp.concatenate([h0, h1], axis=1), w1,
                             preferred_element_type=jnp.float32) + b1
            h1, c1 = gates_to_hc(gates1, c1)
            h1_steps.append(h1)

        # ---- epilogue: batched FC over all timesteps, one lane-dense store --
        h1_all = jnp.concatenate(h1_steps, axis=0)           # (T*B, H)
        out_ref[...] = (jnp.dot(h1_all, wfc_ref[...],
                                preferred_element_type=jnp.float32)
                        + bfc_ref[...]).astype(out_ref.dtype)

    return kernel


def _run_lstm_fc(x_flat, params, T, B_pad):
    wih0_t = params["w_ih0"].T                                    # (E, 4H)
    whh0_t = params["w_hh0"].T                                    # (H, 4H)
    w1 = jnp.concatenate([params["w_ih1"].T, params["w_hh1"].T],  # (2H, 4H)
                         axis=0)
    b0, b1 = params["b0"], params["b1"]
    wfc_pad = jnp.zeros((HIDDEN, VPAD), jnp.float32)
    wfc_pad = wfc_pad.at[:, :VOCAB].set(params["w_fc"].T)         # (H, VPAD)
    bfc_pad = jnp.zeros((1, VPAD), jnp.float32)
    bfc_pad = bfc_pad.at[:, :VOCAB].set(params["b_fc"])           # (1, VPAD)

    kernel = _make_decoder_kernel(T, B_pad)
    # Single invocation, no grid: all operands fit trivially in VMEM and are
    # passed as whole blocks (no per-step pipeline overhead).
    return pl.pallas_call(
        kernel,
        out_shape=jax.ShapeDtypeStruct((T * B_pad, VPAD), jnp.float32),
    )(x_flat, wih0_t, whh0_t, b0, w1, b1, wfc_pad, bfc_pad)


# ---------------------------------------------------------------------------
# pack_padded_sequence(enforce_sorted=False) index order (host-side, concrete)
# ---------------------------------------------------------------------------
def _packed_order(lengths_np, T):
    order = np.argsort(-lengths_np, kind="stable")  # descending by length
    t_idx, b_idx = [], []
    for t in range(T):
        for b in order:
            if lengths_np[b] > t:
                t_idx.append(t)
                b_idx.append(int(b))
    return np.asarray(t_idx, np.int32), np.asarray(b_idx, np.int32)


def decoder_rnn_forward(params, features, captions, lengths_np):
    """Matches DecoderRNN.forward(features, captions, lengths) in eval mode."""
    del features  # unused by the reference forward pass (see module source)
    B, T = captions.shape
    B_pad = max(SUBLANE, ((B + SUBLANE - 1) // SUBLANE) * SUBLANE)
    emb = params["embedding"][captions]                      # (B, T, E)
    # TODO(synk): nn.Dropout omitted — identity in eval mode (no RNG semantics).
    x_tbe = jnp.transpose(emb, (1, 0, 2)).astype(jnp.float32)   # (T, B, E)
    if B_pad != B:
        x_tbe = jnp.pad(x_tbe, ((0, 0), (0, B_pad - B), (0, 0)))
    x_flat = x_tbe.reshape(T * B_pad, EMBED)                 # (T*B_pad, E)
    logits = _run_lstm_fc(x_flat, params, T, B_pad)          # (T*B_pad, VPAD)
    t_idx, b_idx = _packed_order(lengths_np, T)
    flat_idx = t_idx.astype(np.int32) * B_pad + b_idx
    return logits[flat_idx, :VOCAB]                          # (sum(lengths), V)


# ---------------------------------------------------------------------------
# Pure-numpy reference for a correctness check
# ---------------------------------------------------------------------------
def _reference_forward(params, captions_np, lengths_np):
    p = {k: np.asarray(v, np.float32) for k, v in params.items()}
    emb = p["embedding"][captions_np]            # (B, T, E)
    B, T, _ = emb.shape
    H = HIDDEN

    def sig(x):
        return 1.0 / (1.0 + np.exp(-x))

    W = [(p["w_ih0"], p["w_hh0"], p["b0"][0]),
         (p["w_ih1"], p["w_hh1"], p["b1"][0])]
    h = [np.zeros((B, H), np.float32) for _ in range(LAYERS)]
    c = [np.zeros((B, H), np.float32) for _ in range(LAYERS)]
    outs = np.zeros((T, B, H), np.float32)
    for t in range(T):
        xin = emb[:, t, :]
        for l in range(LAYERS):
            wih, whh, b = W[l]
            gates = xin @ wih.T + h[l] @ whh.T + b
            i = sig(gates[:, :H]); f = sig(gates[:, H:2 * H])
            g = np.tanh(gates[:, 2 * H:3 * H]); o = sig(gates[:, 3 * H:])
            c[l] = f * c[l] + i * g
            h[l] = o * np.tanh(c[l])
            xin = h[l]
        outs[t] = h[LAYERS - 1]
    t_idx, b_idx = _packed_order(lengths_np, T)
    packed_h = outs[t_idx, b_idx]
    return packed_h @ p["w_fc"].T + p["b_fc"][0]


# ---------------------------------------------------------------------------
# Deterministic parameter init (shapes from DecoderRNN.__init__)
# ---------------------------------------------------------------------------
def init_params(key):
    ks = jax.random.split(key, 10)
    k = 1.0 / np.sqrt(HIDDEN)
    u = lambda kk, shape: jax.random.uniform(kk, shape, jnp.float32, -k, k)
    return {
        "embedding": jax.random.normal(ks[0], (VOCAB, EMBED), jnp.float32),
        "w_ih0": u(ks[1], (4 * HIDDEN, EMBED)),
        "w_hh0": u(ks[2], (4 * HIDDEN, HIDDEN)),
        "b0": u(ks[3], (1, 4 * HIDDEN)),          # b_ih + b_hh combined
        "w_ih1": u(ks[4], (4 * HIDDEN, HIDDEN)),
        "w_hh1": u(ks[5], (4 * HIDDEN, HIDDEN)),
        "b1": u(ks[6], (1, 4 * HIDDEN)),
        "w_fc": u(ks[7], (VOCAB, HIDDEN)),
        "b_fc": u(ks[8], (1, VOCAB)),
    }


if __name__ == "__main__":
    key = jax.random.PRNGKey(0)
    pkey, ckey = jax.random.split(key)
    params = init_params(pkey)

    B, T = 4, 8
    captions = jax.random.randint(ckey, (B, T), 0, VOCAB, dtype=jnp.int32)
    lengths_np = np.array([8, 5, 7, 3], np.int32)          # concrete, host-side
    features = jnp.zeros((B, EMBED), jnp.float32)           # unused by forward

    out = decoder_rnn_forward(params, features, captions, lengths_np)
    out = jax.block_until_ready(out)

    ref = _reference_forward(params, np.asarray(captions), lengths_np)
    assert out.shape == (int(lengths_np.sum()), VOCAB), out.shape
    # Loose tolerance: MXU f32 matmuls use multi-pass bf16 accumulation.
    np.testing.assert_allclose(np.asarray(out), ref, rtol=1e-2, atol=1e-2)

    print("KERNEL_OK")
</pallas_src>

<mosaic_0001>
module attributes {stable_mosaic.version = 11 : i64} {
  func.func @kernel(%arg0: memref<64x32xf32, #tpu.memory_space<vmem>>, %arg1: memref<32x128xf32, #tpu.memory_space<vmem>>, %arg2: memref<32x128xf32, #tpu.memory_space<vmem>>, %arg3: memref<1x128xf32, #tpu.memory_space<vmem>>, %arg4: memref<64x128xf32, #tpu.memory_space<vmem>>, %arg5: memref<1x128xf32, #tpu.memory_space<vmem>>, %arg6: memref<32x128xf32, #tpu.memory_space<vmem>>, %arg7: memref<1x128xf32, #tpu.memory_space<vmem>>, %arg8: memref<64x128xf32, #tpu.memory_space<vmem>>) attributes {dimension_semantics = [], scalar_prefetch = 0 : i64, scratch_operands = 0 : i64, tpu.core_type = #tpu.core_type<tc>} {
    %c0 = arith.constant 0 : index
    %c0_0 = arith.constant 0 : index
    %0 = vector.load %arg0[%c0, %c0_0] : memref<64x32xf32, #tpu.memory_space<vmem>>, vector<64x32xf32>
    %c0_1 = arith.constant 0 : index
    %c0_2 = arith.constant 0 : index
    %1 = vector.load %arg1[%c0_1, %c0_2] : memref<32x128xf32, #tpu.memory_space<vmem>>, vector<32x128xf32>
    %cst = arith.constant dense<0.000000e+00> : vector<64x128xf32>
    %2 = tpu.matmul %0, %1, %cst {dimension_numbers = #tpu.dot_dimension_numbers<[1], [0], [0], [1], [0, 0, 1, 1], [], []>} : vector<64x32xf32>, vector<32x128xf32>, vector<64x128xf32> -> vector<64x128xf32>
    %c0_3 = arith.constant 0 : index
    %c0_4 = arith.constant 0 : index
    %3 = vector.load %arg3[%c0_3, %c0_4] : memref<1x128xf32, #tpu.memory_space<vmem>>, vector<1x128xf32>
    %4 = vector.broadcast %3 : vector<1x128xf32> to vector<64x128xf32>
    %5 = arith.addf %2, %4 : vector<64x128xf32>
    %c0_5 = arith.constant 0 : index
    %c0_6 = arith.constant 0 : index
    %6 = vector.load %arg2[%c0_5, %c0_6] : memref<32x128xf32, #tpu.memory_space<vmem>>, vector<32x128xf32>
    %c0_7 = arith.constant 0 : index
    %c0_8 = arith.constant 0 : index
    %7 = vector.load %arg4[%c0_7, %c0_8] : memref<64x128xf32, #tpu.memory_space<vmem>>, vector<64x128xf32>
    %c0_9 = arith.constant 0 : index
    %c0_10 = arith.constant 0 : index
    %8 = vector.load %arg5[%c0_9, %c0_10] : memref<1x128xf32, #tpu.memory_space<vmem>>, vector<1x128xf32>
    %cst_11 = arith.constant 0.000000e+00 : f32
    %9 = vector.broadcast %cst_11 : f32 to vector<8x32xf32>
    %10 = vector.extract_strided_slice %5 {offsets = [0, 0], sizes = [8, 128], strides = [1, 1]} : vector<64x128xf32> to vector<8x128xf32>
    %cst_12 = arith.constant dense<0.000000e+00> : vector<8x128xf32>
    %11 = tpu.matmul %9, %6, %cst_12 {dimension_numbers = #tpu.dot_dimension_numbers<[1], [0], [0], [1], [0, 0, 1, 1], [], []>} : vector<8x32xf32>, vector<32x128xf32>, vector<8x128xf32> -> vector<8x128xf32>
    %12 = arith.addf %10, %11 : vector<8x128xf32>
    %13 = vector.extract_strided_slice %12 {offsets = [0, 0], sizes = [8, 32], strides = [1, 1]} : vector<8x128xf32> to vector<8x32xf32>
    %14 = arith.negf %13 : vector<8x32xf32>
    %15 = math.exp %14 : vector<8x32xf32>
    %cst_13 = arith.constant 1.000000e+00 : f32
    %16 = vector.broadcast %cst_13 : f32 to vector<8x32xf32>
    %17 = arith.addf %16, %15 : vector<8x32xf32>
    %18 = arith.divf %16, %17 : vector<8x32xf32>
    %19 = vector.extract_strided_slice %12 {offsets = [0, 32], sizes = [8, 32], strides = [1, 1]} : vector<8x128xf32> to vector<8x32xf32>
    %20 = arith.negf %19 : vector<8x32xf32>
    %21 = math.exp %20 : vector<8x32xf32>
    %cst_14 = arith.constant 1.000000e+00 : f32
    %22 = vector.broadcast %cst_14 : f32 to vector<8x32xf32>
    %23 = arith.addf %22, %21 : vector<8x32xf32>
    %24 = arith.divf %22, %23 : vector<8x32xf32>
    %25 = vector.extract_strided_slice %12 {offsets = [0, 64], sizes = [8, 32], strides = [1, 1]} : vector<8x128xf32> to vector<8x32xf32>
    %26 = math.tanh %25 : vector<8x32xf32>
    %27 = vector.extract_strided_slice %12 {offsets = [0, 96], sizes = [8, 32], strides = [1, 1]} : vector<8x128xf32> to vector<8x32xf32>
    %28 = arith.negf %27 : vector<8x32xf32>
    %29 = math.exp %28 : vector<8x32xf32>
    %cst_15 = arith.constant 1.000000e+00 : f32
    %30 = vector.broadcast %cst_15 : f32 to vector<8x32xf32>
    %31 = arith.addf %30, %29 : vector<8x32xf32>
    %32 = arith.divf %30, %31 : vector<8x32xf32>
    %33 = arith.mulf %24, %9 : vector<8x32xf32>
    %34 = arith.mulf %18, %26 : vector<8x32xf32>
    %35 = arith.addf %33, %34 : vector<8x32xf32>
    %36 = math.tanh %35 : vector<8x32xf32>
    %37 = arith.mulf %32, %36 : vector<8x32xf32>
    %38 = tpu.concatenate %37, %9 in 1 : vector<8x32xf32>, vector<8x32xf32> -> vector<8x64xf32>
    %cst_16 = arith.constant dense<0.000000e+00> : vector<8x128xf32>
    %39 = tpu.matmul %38, %7, %cst_16 {dimension_numbers = #tpu.dot_dimension_numbers<[1], [0], [0], [1], [0, 0, 1, 1], [], []>} : vector<8x64xf32>, vector<64x128xf32>, vector<8x128xf32> -> vector<8x128xf32>
    %40 = vector.broadcast %8 : vector<1x128xf32> to vector<8x128xf32>
    %41 = arith.addf %39, %40 : vector<8x128xf32>
    %42 = vector.extract_strided_slice %41 {offsets = [0, 0], sizes = [8, 32], strides = [1, 1]} : vector<8x128xf32> to vector<8x32xf32>
    %43 = arith.negf %42 : vector<8x32xf32>
    %44 = math.exp %43 : vector<8x32xf32>
    %cst_17 = arith.constant 1.000000e+00 : f32
    %45 = vector.broadcast %cst_17 : f32 to vector<8x32xf32>
    %46 = arith.addf %45, %44 : vector<8x32xf32>
    %47 = arith.divf %45, %46 : vector<8x32xf32>
    %48 = vector.extract_strided_slice %41 {offsets = [0, 32], sizes = [8, 32], strides = [1, 1]} : vector<8x128xf32> to vector<8x32xf32>
    %49 = arith.negf %48 : vector<8x32xf32>
    %50 = math.exp %49 : vector<8x32xf32>
    %cst_18 = arith.constant 1.000000e+00 : f32
    %51 = vector.broadcast %cst_18 : f32 to vector<8x32xf32>
    %52 = arith.addf %51, %50 : vector<8x32xf32>
    %53 = arith.divf %51, %52 : vector<8x32xf32>
    %54 = vector.extract_strided_slice %41 {offsets = [0, 64], sizes = [8, 32], strides = [1, 1]} : vector<8x128xf32> to vector<8x32xf32>
    %55 = math.tanh %54 : vector<8x32xf32>
    %56 = vector.extract_strided_slice %41 {offsets = [0, 96], sizes = [8, 32], strides = [1, 1]} : vector<8x128xf32> to vector<8x32xf32>
    %57 = arith.negf %56 : vector<8x32xf32>
    %58 = math.exp %57 : vector<8x32xf32>
    %cst_19 = arith.constant 1.000000e+00 : f32
    %59 = vector.broadcast %cst_19 : f32 to vector<8x32xf32>
    %60 = arith.addf %59, %58 : vector<8x32xf32>
    %61 = arith.divf %59, %60 : vector<8x32xf32>
    %62 = arith.mulf %53, %9 : vector<8x32xf32>
    %63 = arith.mulf %47, %55 : vector<8x32xf32>
    %64 = arith.addf %62, %63 : vector<8x32xf32>
    %65 = math.tanh %64 : vector<8x32xf32>
    %66 = arith.mulf %61, %65 : vector<8x32xf32>
    %67 = vector.extract_strided_slice %5 {offsets = [8, 0], sizes = [8, 128], strides = [1, 1]} : vector<64x128xf32> to vector<8x128xf32>
    %cst_20 = arith.constant dense<0.000000e+00> : vector<8x128xf32>
    %68 = tpu.matmul %37, %6, %cst_20 {dimension_numbers = #tpu.dot_dimension_numbers<[1], [0], [0], [1], [0, 0, 1, 1], [], []>} : vector<8x32xf32>, vector<32x128xf32>, vector<8x128xf32> -> vector<8x128xf32>
    %69 = arith.addf %67, %68 : vector<8x128xf32>
    %70 = vector.extract_strided_slice %69 {offsets = [0, 0], sizes = [8, 32], strides = [1, 1]} : vector<8x128xf32> to vector<8x32xf32>
    %71 = arith.negf %70 : vector<8x32xf32>
    %72 = math.exp %71 : vector<8x32xf32>
    %cst_21 = arith.constant 1.000000e+00 : f32
    %73 = vector.broadcast %cst_21 : f32 to vector<8x32xf32>
    %74 = arith.addf %73, %72 : vector<8x32xf32>
    %75 = arith.divf %73, %74 : vector<8x32xf32>
    %76 = vector.extract_strided_slice %69 {offsets = [0, 32], sizes = [8, 32], strides = [1, 1]} : vector<8x128xf32> to vector<8x32xf32>
    %77 = arith.negf %76 : vector<8x32xf32>
    %78 = math.exp %77 : vector<8x32xf32>
    %cst_22 = arith.constant 1.000000e+00 : f32
    %79 = vector.broadcast %cst_22 : f32 to vector<8x32xf32>
    %80 = arith.addf %79, %78 : vector<8x32xf32>
    %81 = arith.divf %79, %80 : vector<8x32xf32>
    %82 = vector.extract_strided_slice %69 {offsets = [0, 64], sizes = [8, 32], strides = [1, 1]} : vector<8x128xf32> to vector<8x32xf32>
    %83 = math.tanh %82 : vector<8x32xf32>
    %84 = vector.extract_strided_slice %69 {offsets = [0, 96], sizes = [8, 32], strides = [1, 1]} : vector<8x128xf32> to vector<8x32xf32>
    %85 = arith.negf %84 : vector<8x32xf32>
    %86 = math.exp %85 : vector<8x32xf32>
    %cst_23 = arith.constant 1.000000e+00 : f32
    %87 = vector.broadcast %cst_23 : f32 to vector<8x32xf32>
    %88 = arith.addf %87, %86 : vector<8x32xf32>
    %89 = arith.divf %87, %88 : vector<8x32xf32>
    %90 = arith.mulf %81, %35 : vector<8x32xf32>
    %91 = arith.mulf %75, %83 : vector<8x32xf32>
    %92 = arith.addf %90, %91 : vector<8x32xf32>
    %93 = math.tanh %92 : vector<8x32xf32>
    %94 = arith.mulf %89, %93 : vector<8x32xf32>
    %95 = tpu.concatenate %94, %66 in 1 : vector<8x32xf32>, vector<8x32xf32> -> vector<8x64xf32>
    %cst_24 = arith.constant dense<0.000000e+00> : vector<8x128xf32>
    %96 = tpu.matmul %95, %7, %cst_24 {dimension_numbers = #tpu.dot_dimension_numbers<[1], [0], [0], [1], [0, 0, 1, 1], [], []>} : vector<8x64xf32>, vector<64x128xf32>, vector<8x128xf32> -> vector<8x128xf32>
    %97 = vector.broadcast %8 : vector<1x128xf32> to vector<8x128xf32>
    %98 = arith.addf %96, %97 : vector<8x128xf32>
    %99 = vector.extract_strided_slice %98 {offsets = [0, 0], sizes = [8, 32], strides = [1, 1]} : vector<8x128xf32> to vector<8x32xf32>
    %100 = arith.negf %99 : vector<8x32xf32>
    %101 = math.exp %100 : vector<8x32xf32>
    %cst_25 = arith.constant 1.000000e+00 : f32
    %102 = vector.broadcast %cst_25 : f32 to vector<8x32xf32>
    %103 = arith.addf %102, %101 : vector<8x32xf32>
    %104 = arith.divf %102, %103 : vector<8x32xf32>
    %105 = vector.extract_strided_slice %98 {offsets = [0, 32], sizes = [8, 32], strides = [1, 1]} : vector<8x128xf32> to vector<8x32xf32>
    %106 = arith.negf %105 : vector<8x32xf32>
    %107 = math.exp %106 : vector<8x32xf32>
    %cst_26 = arith.constant 1.000000e+00 : f32
    %108 = vector.broadcast %cst_26 : f32 to vector<8x32xf32>
    %109 = arith.addf %108, %107 : vector<8x32xf32>
    %110 = arith.divf %108, %109 : vector<8x32xf32>
    %111 = vector.extract_strided_slice %98 {offsets = [0, 64], sizes = [8, 32], strides = [1, 1]} : vector<8x128xf32> to vector<8x32xf32>
    %112 = math.tanh %111 : vector<8x32xf32>
    %113 = vector.extract_strided_slice %98 {offsets = [0, 96], sizes = [8, 32], strides = [1, 1]} : vector<8x128xf32> to vector<8x32xf32>
    %114 = arith.negf %113 : vector<8x32xf32>
    %115 = math.exp %114 : vector<8x32xf32>
    %cst_27 = arith.constant 1.000000e+00 : f32
    %116 = vector.broadcast %cst_27 : f32 to vector<8x32xf32>
    %117 = arith.addf %116, %115 : vector<8x32xf32>
    %118 = arith.divf %116, %117 : vector<8x32xf32>
    %119 = arith.mulf %110, %64 : vector<8x32xf32>
    %120 = arith.mulf %104, %112 : vector<8x32xf32>
    %121 = arith.addf %119, %120 : vector<8x32xf32>
    %122 = math.tanh %121 : vector<8x32xf32>
    %123 = arith.mulf %118, %122 : vector<8x32xf32>
    %124 = vector.extract_strided_slice %5 {offsets = [16, 0], sizes = [8, 128], strides = [1, 1]} : vector<64x128xf32> to vector<8x128xf32>
    %cst_28 = arith.constant dense<0.000000e+00> : vector<8x128xf32>
    %125 = tpu.matmul %94, %6, %cst_28 {dimension_numbers = #tpu.dot_dimension_numbers<[1], [0], [0], [1], [0, 0, 1, 1], [], []>} : vector<8x32xf32>, vector<32x128xf32>, vector<8x128xf32> -> vector<8x128xf32>
    %126 = arith.addf %124, %125 : vector<8x128xf32>
    %127 = vector.extract_strided_slice %126 {offsets = [0, 0], sizes = [8, 32], strides = [1, 1]} : vector<8x128xf32> to vector<8x32xf32>
    %128 = arith.negf %127 : vector<8x32xf32>
    %129 = math.exp %128 : vector<8x32xf32>
    %cst_29 = arith.constant 1.000000e+00 : f32
    %130 = vector.broadcast %cst_29 : f32 to vector<8x32xf32>
    %131 = arith.addf %130, %129 : vector<8x32xf32>
    %132 = arith.divf %130, %131 : vector<8x32xf32>
    %133 = vector.extract_strided_slice %126 {offsets = [0, 32], sizes = [8, 32], strides = [1, 1]} : vector<8x128xf32> to vector<8x32xf32>
    %134 = arith.negf %133 : vector<8x32xf32>
    %135 = math.exp %134 : vector<8x32xf32>
    %cst_30 = arith.constant 1.000000e+00 : f32
    %136 = vector.broadcast %cst_30 : f32 to vector<8x32xf32>
    %137 = arith.addf %136, %135 : vector<8x32xf32>
    %138 = arith.divf %136, %137 : vector<8x32xf32>
    %139 = vector.extract_strided_slice %126 {offsets = [0, 64], sizes = [8, 32], strides = [1, 1]} : vector<8x128xf32> to vector<8x32xf32>
    %140 = math.tanh %139 : vector<8x32xf32>
    %141 = vector.extract_strided_slice %126 {offsets = [0, 96], sizes = [8, 32], strides = [1, 1]} : vector<8x128xf32> to vector<8x32xf32>
    %142 = arith.negf %141 : vector<8x32xf32>
    %143 = math.exp %142 : vector<8x32xf32>
    %cst_31 = arith.constant 1.000000e+00 : f32
    %144 = vector.broadcast %cst_31 : f32 to vector<8x32xf32>
    %145 = arith.addf %144, %143 : vector<8x32xf32>
    %146 = arith.divf %144, %145 : vector<8x32xf32>
    %147 = arith.mulf %138, %92 : vector<8x32xf32>
    %148 = arith.mulf %132, %140 : vector<8x32xf32>
    %149 = arith.addf %147, %148 : vector<8x32xf32>
    %150 = math.tanh %149 : vector<8x32xf32>
    %151 = arith.mulf %146, %150 : vector<8x32xf32>
    %152 = tpu.concatenate %151, %123 in 1 : vector<8x32xf32>, vector<8x32xf32> -> vector<8x64xf32>
    %cst_32 = arith.constant dense<0.000000e+00> : vector<8x128xf32>
    %153 = tpu.matmul %152, %7, %cst_32 {dimension_numbers = #tpu.dot_dimension_numbers<[1], [0], [0], [1], [0, 0, 1, 1], [], []>} : vector<8x64xf32>, vector<64x128xf32>, vector<8x128xf32> -> vector<8x128xf32>
    %154 = vector.broadcast %8 : vector<1x128xf32> to vector<8x128xf32>
    %155 = arith.addf %153, %154 : vector<8x128xf32>
    %156 = vector.extract_strided_slice %155 {offsets = [0, 0], sizes = [8, 32], strides = [1, 1]} : vector<8x128xf32> to vector<8x32xf32>
    %157 = arith.negf %156 : vector<8x32xf32>
    %158 = math.exp %157 : vector<8x32xf32>
    %cst_33 = arith.constant 1.000000e+00 : f32
    %159 = vector.broadcast %cst_33 : f32 to vector<8x32xf32>
    %160 = arith.addf %159, %158 : vector<8x32xf32>
    %161 = arith.divf %159, %160 : vector<8x32xf32>
    %162 = vector.extract_strided_slice %155 {offsets = [0, 32], sizes = [8, 32], strides = [1, 1]} : vector<8x128xf32> to vector<8x32xf32>
    %163 = arith.negf %162 : vector<8x32xf32>
    %164 = math.exp %163 : vector<8x32xf32>
    %cst_34 = arith.constant 1.000000e+00 : f32
    %165 = vector.broadcast %cst_34 : f32 to vector<8x32xf32>
    %166 = arith.addf %165, %164 : vector<8x32xf32>
    %167 = arith.divf %165, %166 : vector<8x32xf32>
    %168 = vector.extract_strided_slice %155 {offsets = [0, 64], sizes = [8, 32], strides = [1, 1]} : vector<8x128xf32> to vector<8x32xf32>
    %169 = math.tanh %168 : vector<8x32xf32>
    %170 = vector.extract_strided_slice %155 {offsets = [0, 96], sizes = [8, 32], strides = [1, 1]} : vector<8x128xf32> to vector<8x32xf32>
    %171 = arith.negf %170 : vector<8x32xf32>
    %172 = math.exp %171 : vector<8x32xf32>
    %cst_35 = arith.constant 1.000000e+00 : f32
    %173 = vector.broadcast %cst_35 : f32 to vector<8x32xf32>
    %174 = arith.addf %173, %172 : vector<8x32xf32>
    %175 = arith.divf %173, %174 : vector<8x32xf32>
    %176 = arith.mulf %167, %121 : vector<8x32xf32>
    %177 = arith.mulf %161, %169 : vector<8x32xf32>
    %178 = arith.addf %176, %177 : vector<8x32xf32>
    %179 = math.tanh %178 : vector<8x32xf32>
    %180 = arith.mulf %175, %179 : vector<8x32xf32>
    %181 = vector.extract_strided_slice %5 {offsets = [24, 0], sizes = [8, 128], strides = [1, 1]} : vector<64x128xf32> to vector<8x128xf32>
    %cst_36 = arith.constant dense<0.000000e+00> : vector<8x128xf32>
    %182 = tpu.matmul %151, %6, %cst_36 {dimension_numbers = #tpu.dot_dimension_numbers<[1], [0], [0], [1], [0, 0, 1, 1], [], []>} : vector<8x32xf32>, vector<32x128xf32>, vector<8x128xf32> -> vector<8x128xf32>
    %183 = arith.addf %181, %182 : vector<8x128xf32>
    %184 = vector.extract_strided_slice %183 {offsets = [0, 0], sizes = [8, 32], strides = [1, 1]} : vector<8x128xf32> to vector<8x32xf32>
    %185 = arith.negf %184 : vector<8x32xf32>
    %186 = math.exp %185 : vector<8x32xf32>
    %cst_37 = arith.constant 1.000000e+00 : f32
    %187 = vector.broadcast %cst_37 : f32 to vector<8x32xf32>
    %188 = arith.addf %187, %186 : vector<8x32xf32>
    %189 = arith.divf %187, %188 : vector<8x32xf32>
    %190 = vector.extract_strided_slice %183 {offsets = [0, 32], sizes = [8, 32], strides = [1, 1]} : vector<8x128xf32> to vector<8x32xf32>
    %191 = arith.negf %190 : vector<8x32xf32>
    %192 = math.exp %191 : vector<8x32xf32>
    %cst_38 = arith.constant 1.000000e+00 : f32
    %193 = vector.broadcast %cst_38 : f32 to vector<8x32xf32>
    %194 = arith.addf %193, %192 : vector<8x32xf32>
    %195 = arith.divf %193, %194 : vector<8x32xf32>
    %196 = vector.extract_strided_slice %183 {offsets = [0, 64], sizes = [8, 32], strides = [1, 1]} : vector<8x128xf32> to vector<8x32xf32>
    %197 = math.tanh %196 : vector<8x32xf32>
    %198 = vector.extract_strided_slice %183 {offsets = [0, 96], sizes = [8, 32], strides = [1, 1]} : vector<8x128xf32> to vector<8x32xf32>
    %199 = arith.negf %198 : vector<8x32xf32>
    %200 = math.exp %199 : vector<8x32xf32>
    %cst_39 = arith.constant 1.000000e+00 : f32
    %201 = vector.broadcast %cst_39 : f32 to vector<8x32xf32>
    %202 = arith.addf %201, %200 : vector<8x32xf32>
    %203 = arith.divf %201, %202 : vector<8x32xf32>
    %204 = arith.mulf %195, %149 : vector<8x32xf32>
    %205 = arith.mulf %189, %197 : vector<8x32xf32>
    %206 = arith.addf %204, %205 : vector<8x32xf32>
    %207 = math.tanh %206 : vector<8x32xf32>
    %208 = arith.mulf %203, %207 : vector<8x32xf32>
    %209 = tpu.concatenate %208, %180 in 1 : vector<8x32xf32>, vector<8x32xf32> -> vector<8x64xf32>
    %cst_40 = arith.constant dense<0.000000e+00> : vector<8x128xf32>
    %210 = tpu.matmul %209, %7, %cst_40 {dimension_numbers = #tpu.dot_dimension_numbers<[1], [0], [0], [1], [0, 0, 1, 1], [], []>} : vector<8x64xf32>, vector<64x128xf32>, vector<8x128xf32> -> vector<8x128xf32>
    %211 = vector.broadcast %8 : vector<1x128xf32> to vector<8x128xf32>
    %212 = arith.addf %210, %211 : vector<8x128xf32>
    %213 = vector.extract_strided_slice %212 {offsets = [0, 0], sizes = [8, 32], strides = [1, 1]} : vector<8x128xf32> to vector<8x32xf32>
    %214 = arith.negf %213 : vector<8x32xf32>
    %215 = math.exp %214 : vector<8x32xf32>
    %cst_41 = arith.constant 1.000000e+00 : f32
    %216 = vector.broadcast %cst_41 : f32 to vector<8x32xf32>
    %217 = arith.addf %216, %215 : vector<8x32xf32>
    %218 = arith.divf %216, %217 : vector<8x32xf32>
    %219 = vector.extract_strided_slice %212 {offsets = [0, 32], sizes = [8, 32], strides = [1, 1]} : vector<8x128xf32> to vector<8x32xf32>
    %220 = arith.negf %219 : vector<8x32xf32>
    %221 = math.exp %220 : vector<8x32xf32>
    %cst_42 = arith.constant 1.000000e+00 : f32
    %222 = vector.broadcast %cst_42 : f32 to vector<8x32xf32>
    %223 = arith.addf %222, %221 : vector<8x32xf32>
    %224 = arith.divf %222, %223 : vector<8x32xf32>
    %225 = vector.extract_strided_slice %212 {offsets = [0, 64], sizes = [8, 32], strides = [1, 1]} : vector<8x128xf32> to vector<8x32xf32>
    %226 = math.tanh %225 : vector<8x32xf32>
    %227 = vector.extract_strided_slice %212 {offsets = [0, 96], sizes = [8, 32], strides = [1, 1]} : vector<8x128xf32> to vector<8x32xf32>
    %228 = arith.negf %227 : vector<8x32xf32>
    %229 = math.exp %228 : vector<8x32xf32>
    %cst_43 = arith.constant 1.000000e+00 : f32
    %230 = vector.broadcast %cst_43 : f32 to vector<8x32xf32>
    %231 = arith.addf %230, %229 : vector<8x32xf32>
    %232 = arith.divf %230, %231 : vector<8x32xf32>
    %233 = arith.mulf %224, %178 : vector<8x32xf32>
    %234 = arith.mulf %218, %226 : vector<8x32xf32>
    %235 = arith.addf %233, %234 : vector<8x32xf32>
    %236 = math.tanh %235 : vector<8x32xf32>
    %237 = arith.mulf %232, %236 : vector<8x32xf32>
    %238 = vector.extract_strided_slice %5 {offsets = [32, 0], sizes = [8, 128], strides = [1, 1]} : vector<64x128xf32> to vector<8x128xf32>
    %cst_44 = arith.constant dense<0.000000e+00> : vector<8x128xf32>
    %239 = tpu.matmul %208, %6, %cst_44 {dimension_numbers = #tpu.dot_dimension_numbers<[1], [0], [0], [1], [0, 0, 1, 1], [], []>} : vector<8x32xf32>, vector<32x128xf32>, vector<8x128xf32> -> vector<8x128xf32>
    %240 = arith.addf %238, %239 : vector<8x128xf32>
    %241 = vector.extract_strided_slice %240 {offsets = [0, 0], sizes = [8, 32], strides = [1, 1]} : vector<8x128xf32> to vector<8x32xf32>
    %242 = arith.negf %241 : vector<8x32xf32>
    %243 = math.exp %242 : vector<8x32xf32>
    %cst_45 = arith.constant 1.000000e+00 : f32
    %244 = vector.broadcast %cst_45 : f32 to vector<8x32xf32>
    %245 = arith.addf %244, %243 : vector<8x32xf32>
    %246 = arith.divf %244, %245 : vector<8x32xf32>
    %247 = vector.extract_strided_slice %240 {offsets = [0, 32], sizes = [8, 32], strides = [1, 1]} : vector<8x128xf32> to vector<8x32xf32>
    %248 = arith.negf %247 : vector<8x32xf32>
    %249 = math.exp %248 : vector<8x32xf32>
    %cst_46 = arith.constant 1.000000e+00 : f32
    %250 = vector.broadcast %cst_46 : f32 to vector<8x32xf32>
    %251 = arith.addf %250, %249 : vector<8x32xf32>
    %252 = arith.divf %250, %251 : vector<8x32xf32>
    %253 = vector.extract_strided_slice %240 {offsets = [0, 64], sizes = [8, 32], strides = [1, 1]} : vector<8x128xf32> to vector<8x32xf32>
    %254 = math.tanh %253 : vector<8x32xf32>
    %255 = vector.extract_strided_slice %240 {offsets = [0, 96], sizes = [8, 32], strides = [1, 1]} : vector<8x128xf32> to vector<8x32xf32>
    %256 = arith.negf %255 : vector<8x32xf32>
    %257 = math.exp %256 : vector<8x32xf32>
    %cst_47 = arith.constant 1.000000e+00 : f32
    %258 = vector.broadcast %cst_47 : f32 to vector<8x32xf32>
    %259 = arith.addf %258, %257 : vector<8x32xf32>
    %260 = arith.divf %258, %259 : vector<8x32xf32>
    %261 = arith.mulf %252, %206 : vector<8x32xf32>
    %262 = arith.mulf %246, %254 : vector<8x32xf32>
    %263 = arith.addf %261, %262 : vector<8x32xf32>
    %264 = math.tanh %263 : vector<8x32xf32>
    %265 = arith.mulf %260, %264 : vector<8x32xf32>
    %266 = tpu.concatenate %265, %237 in 1 : vector<8x32xf32>, vector<8x32xf32> -> vector<8x64xf32>
    %cst_48 = arith.constant dense<0.000000e+00> : vector<8x128xf32>
    %267 = tpu.matmul %266, %7, %cst_48 {dimension_numbers = #tpu.dot_dimension_numbers<[1], [0], [0], [1], [0, 0, 1, 1], [], []>} : vector<8x64xf32>, vector<64x128xf32>, vector<8x128xf32> -> vector<8x128xf32>
    %268 = vector.broadcast %8 : vector<1x128xf32> to vector<8x128xf32>
    %269 = arith.addf %267, %268 : vector<8x128xf32>
    %270 = vector.extract_strided_slice %269 {offsets = [0, 0], sizes = [8, 32], strides = [1, 1]} : vector<8x128xf32> to vector<8x32xf32>
    %271 = arith.negf %270 : vector<8x32xf32>
    %272 = math.exp %271 : vector<8x32xf32>
    %cst_49 = arith.constant 1.000000e+00 : f32
    %273 = vector.broadcast %cst_49 : f32 to vector<8x32xf32>
    %274 = arith.addf %273, %272 : vector<8x32xf32>
    %275 = arith.divf %273, %274 : vector<8x32xf32>
    %276 = vector.extract_strided_slice %269 {offsets = [0, 32], sizes = [8, 32], strides = [1, 1]} : vector<8x128xf32> to vector<8x32xf32>
    %277 = arith.negf %276 : vector<8x32xf32>
    %278 = math.exp %277 : vector<8x32xf32>
    %cst_50 = arith.constant 1.000000e+00 : f32
    %279 = vector.broadcast %cst_50 : f32 to vector<8x32xf32>
    %280 = arith.addf %279, %278 : vector<8x32xf32>
    %281 = arith.divf %279, %280 : vector<8x32xf32>
    %282 = vector.extract_strided_slice %269 {offsets = [0, 64], sizes = [8, 32], strides = [1, 1]} : vector<8x128xf32> to vector<8x32xf32>
    %283 = math.tanh %282 : vector<8x32xf32>
    %284 = vector.extract_strided_slice %269 {offsets = [0, 96], sizes = [8, 32], strides = [1, 1]} : vector<8x128xf32> to vector<8x32xf32>
    %285 = arith.negf %284 : vector<8x32xf32>
    %286 = math.exp %285 : vector<8x32xf32>
    %cst_51 = arith.constant 1.000000e+00 : f32
    %287 = vector.broadcast %cst_51 : f32 to vector<8x32xf32>
    %288 = arith.addf %287, %286 : vector<8x32xf32>
    %289 = arith.divf %287, %288 : vector<8x32xf32>
    %290 = arith.mulf %281, %235 : vector<8x32xf32>
    %291 = arith.mulf %275, %283 : vector<8x32xf32>
    %292 = arith.addf %290, %291 : vector<8x32xf32>
    %293 = math.tanh %292 : vector<8x32xf32>
    %294 = arith.mulf %289, %293 : vector<8x32xf32>
    %295 = vector.extract_strided_slice %5 {offsets = [40, 0], sizes = [8, 128], strides = [1, 1]} : vector<64x128xf32> to vector<8x128xf32>
    %cst_52 = arith.constant dense<0.000000e+00> : vector<8x128xf32>
    %296 = tpu.matmul %265, %6, %cst_52 {dimension_numbers = #tpu.dot_dimension_numbers<[1], [0], [0], [1], [0, 0, 1, 1], [], []>} : vector<8x32xf32>, vector<32x128xf32>, vector<8x128xf32> -> vector<8x128xf32>
    %297 = arith.addf %295, %296 : vector<8x128xf32>
    %298 = vector.extract_strided_slice %297 {offsets = [0, 0], sizes = [8, 32], strides = [1, 1]} : vector<8x128xf32> to vector<8x32xf32>
    %299 = arith.negf %298 : vector<8x32xf32>
    %300 = math.exp %299 : vector<8x32xf32>
    %cst_53 = arith.constant 1.000000e+00 : f32
    %301 = vector.broadcast %cst_53 : f32 to vector<8x32xf32>
    %302 = arith.addf %301, %300 : vector<8x32xf32>
    %303 = arith.divf %301, %302 : vector<8x32xf32>
    %304 = vector.extract_strided_slice %297 {offsets = [0, 32], sizes = [8, 32], strides = [1, 1]} : vector<8x128xf32> to vector<8x32xf32>
    %305 = arith.negf %304 : vector<8x32xf32>
    %306 = math.exp %305 : vector<8x32xf32>
    %cst_54 = arith.constant 1.000000e+00 : f32
    %307 = vector.broadcast %cst_54 : f32 to vector<8x32xf32>
    %308 = arith.addf %307, %306 : vector<8x32xf32>
    %309 = arith.divf %307, %308 : vector<8x32xf32>
    %310 = vector.extract_strided_slice %297 {offsets = [0, 64], sizes = [8, 32], strides = [1, 1]} : vector<8x128xf32> to vector<8x32xf32>
    %311 = math.tanh %310 : vector<8x32xf32>
    %312 = vector.extract_strided_slice %297 {offsets = [0, 96], sizes = [8, 32], strides = [1, 1]} : vector<8x128xf32> to vector<8x32xf32>
    %313 = arith.negf %312 : vector<8x32xf32>
    %314 = math.exp %313 : vector<8x32xf32>
    %cst_55 = arith.constant 1.000000e+00 : f32
    %315 = vector.broadcast %cst_55 : f32 to vector<8x32xf32>
    %316 = arith.addf %315, %314 : vector<8x32xf32>
    %317 = arith.divf %315, %316 : vector<8x32xf32>
    %318 = arith.mulf %309, %263 : vector<8x32xf32>
    %319 = arith.mulf %303, %311 : vector<8x32xf32>
    %320 = arith.addf %318, %319 : vector<8x32xf32>
    %321 = math.tanh %320 : vector<8x32xf32>
    %322 = arith.mulf %317, %321 : vector<8x32xf32>
    %323 = tpu.concatenate %322, %294 in 1 : vector<8x32xf32>, vector<8x32xf32> -> vector<8x64xf32>
    %cst_56 = arith.constant dense<0.000000e+00> : vector<8x128xf32>
    %324 = tpu.matmul %323, %7, %cst_56 {dimension_numbers = #tpu.dot_dimension_numbers<[1], [0], [0], [1], [0, 0, 1, 1], [], []>} : vector<8x64xf32>, vector<64x128xf32>, vector<8x128xf32> -> vector<8x128xf32>
    %325 = vector.broadcast %8 : vector<1x128xf32> to vector<8x128xf32>
    %326 = arith.addf %324, %325 : vector<8x128xf32>
    %327 = vector.extract_strided_slice %326 {offsets = [0, 0], sizes = [8, 32], strides = [1, 1]} : vector<8x128xf32> to vector<8x32xf32>
    %328 = arith.negf %327 : vector<8x32xf32>
    %329 = math.exp %328 : vector<8x32xf32>
    %cst_57 = arith.constant 1.000000e+00 : f32
    %330 = vector.broadcast %cst_57 : f32 to vector<8x32xf32>
    %331 = arith.addf %330, %329 : vector<8x32xf32>
    %332 = arith.divf %330, %331 : vector<8x32xf32>
    %333 = vector.extract_strided_slice %326 {offsets = [0, 32], sizes = [8, 32], strides = [1, 1]} : vector<8x128xf32> to vector<8x32xf32>
    %334 = arith.negf %333 : vector<8x32xf32>
    %335 = math.exp %334 : vector<8x32xf32>
    %cst_58 = arith.constant 1.000000e+00 : f32
    %336 = vector.broadcast %cst_58 : f32 to vector<8x32xf32>
    %337 = arith.addf %336, %335 : vector<8x32xf32>
    %338 = arith.divf %336, %337 : vector<8x32xf32>
    %339 = vector.extract_strided_slice %326 {offsets = [0, 64], sizes = [8, 32], strides = [1, 1]} : vector<8x128xf32> to vector<8x32xf32>
    %340 = math.tanh %339 : vector<8x32xf32>
    %341 = vector.extract_strided_slice %326 {offsets = [0, 96], sizes = [8, 32], strides = [1, 1]} : vector<8x128xf32> to vector<8x32xf32>
    %342 = arith.negf %341 : vector<8x32xf32>
    %343 = math.exp %342 : vector<8x32xf32>
    %cst_59 = arith.constant 1.000000e+00 : f32
    %344 = vector.broadcast %cst_59 : f32 to vector<8x32xf32>
    %345 = arith.addf %344, %343 : vector<8x32xf32>
    %346 = arith.divf %344, %345 : vector<8x32xf32>
    %347 = arith.mulf %338, %292 : vector<8x32xf32>
    %348 = arith.mulf %332, %340 : vector<8x32xf32>
    %349 = arith.addf %347, %348 : vector<8x32xf32>
    %350 = math.tanh %349 : vector<8x32xf32>
    %351 = arith.mulf %346, %350 : vector<8x32xf32>
    %352 = vector.extract_strided_slice %5 {offsets = [48, 0], sizes = [8, 128], strides = [1, 1]} : vector<64x128xf32> to vector<8x128xf32>
    %cst_60 = arith.constant dense<0.000000e+00> : vector<8x128xf32>
    %353 = tpu.matmul %322, %6, %cst_60 {dimension_numbers = #tpu.dot_dimension_numbers<[1], [0], [0], [1], [0, 0, 1, 1], [], []>} : vector<8x32xf32>, vector<32x128xf32>, vector<8x128xf32> -> vector<8x128xf32>
    %354 = arith.addf %352, %353 : vector<8x128xf32>
    %355 = vector.extract_strided_slice %354 {offsets = [0, 0], sizes = [8, 32], strides = [1, 1]} : vector<8x128xf32> to vector<8x32xf32>
    %356 = arith.negf %355 : vector<8x32xf32>
    %357 = math.exp %356 : vector<8x32xf32>
    %cst_61 = arith.constant 1.000000e+00 : f32
    %358 = vector.broadcast %cst_61 : f32 to vector<8x32xf32>
    %359 = arith.addf %358, %357 : vector<8x32xf32>
    %360 = arith.divf %358, %359 : vector<8x32xf32>
    %361 = vector.extract_strided_slice %354 {offsets = [0, 32], sizes = [8, 32], strides = [1, 1]} : vector<8x128xf32> to vector<8x32xf32>
    %362 = arith.negf %361 : vector<8x32xf32>
    %363 = math.exp %362 : vector<8x32xf32>
    %cst_62 = arith.constant 1.000000e+00 : f32
    %364 = vector.broadcast %cst_62 : f32 to vector<8x32xf32>
    %365 = arith.addf %364, %363 : vector<8x32xf32>
    %366 = arith.divf %364, %365 : vector<8x32xf32>
    %367 = vector.extract_strided_slice %354 {offsets = [0, 64], sizes = [8, 32], strides = [1, 1]} : vector<8x128xf32> to vector<8x32xf32>
    %368 = math.tanh %367 : vector<8x32xf32>
    %369 = vector.extract_strided_slice %354 {offsets = [0, 96], sizes = [8, 32], strides = [1, 1]} : vector<8x128xf32> to vector<8x32xf32>
    %370 = arith.negf %369 : vector<8x32xf32>
    %371 = math.exp %370 : vector<8x32xf32>
    %cst_63 = arith.constant 1.000000e+00 : f32
    %372 = vector.broadcast %cst_63 : f32 to vector<8x32xf32>
    %373 = arith.addf %372, %371 : vector<8x32xf32>
    %374 = arith.divf %372, %373 : vector<8x32xf32>
    %375 = arith.mulf %366, %320 : vector<8x32xf32>
    %376 = arith.mulf %360, %368 : vector<8x32xf32>
    %377 = arith.addf %375, %376 : vector<8x32xf32>
    %378 = math.tanh %377 : vector<8x32xf32>
    %379 = arith.mulf %374, %378 : vector<8x32xf32>
    %380 = tpu.concatenate %379, %351 in 1 : vector<8x32xf32>, vector<8x32xf32> -> vector<8x64xf32>
    %cst_64 = arith.constant dense<0.000000e+00> : vector<8x128xf32>
    %381 = tpu.matmul %380, %7, %cst_64 {dimension_numbers = #tpu.dot_dimension_numbers<[1], [0], [0], [1], [0, 0, 1, 1], [], []>} : vector<8x64xf32>, vector<64x128xf32>, vector<8x128xf32> -> vector<8x128xf32>
    %382 = vector.broadcast %8 : vector<1x128xf32> to vector<8x128xf32>
    %383 = arith.addf %381, %382 : vector<8x128xf32>
    %384 = vector.extract_strided_slice %383 {offsets = [0, 0], sizes = [8, 32], strides = [1, 1]} : vector<8x128xf32> to vector<8x32xf32>
    %385 = arith.negf %384 : vector<8x32xf32>
    %386 = math.exp %385 : vector<8x32xf32>
    %cst_65 = arith.constant 1.000000e+00 : f32
    %387 = vector.broadcast %cst_65 : f32 to vector<8x32xf32>
    %388 = arith.addf %387, %386 : vector<8x32xf32>
    %389 = arith.divf %387, %388 : vector<8x32xf32>
    %390 = vector.extract_strided_slice %383 {offsets = [0, 32], sizes = [8, 32], strides = [1, 1]} : vector<8x128xf32> to vector<8x32xf32>
    %391 = arith.negf %390 : vector<8x32xf32>
    %392 = math.exp %391 : vector<8x32xf32>
    %cst_66 = arith.constant 1.000000e+00 : f32
    %393 = vector.broadcast %cst_66 : f32 to vector<8x32xf32>
    %394 = arith.addf %393, %392 : vector<8x32xf32>
    %395 = arith.divf %393, %394 : vector<8x32xf32>
    %396 = vector.extract_strided_slice %383 {offsets = [0, 64], sizes = [8, 32], strides = [1, 1]} : vector<8x128xf32> to vector<8x32xf32>
    %397 = math.tanh %396 : vector<8x32xf32>
    %398 = vector.extract_strided_slice %383 {offsets = [0, 96], sizes = [8, 32], strides = [1, 1]} : vector<8x128xf32> to vector<8x32xf32>
    %399 = arith.negf %398 : vector<8x32xf32>
    %400 = math.exp %399 : vector<8x32xf32>
    %cst_67 = arith.constant 1.000000e+00 : f32
    %401 = vector.broadcast %cst_67 : f32 to vector<8x32xf32>
    %402 = arith.addf %401, %400 : vector<8x32xf32>
    %403 = arith.divf %401, %402 : vector<8x32xf32>
    %404 = arith.mulf %395, %349 : vector<8x32xf32>
    %405 = arith.mulf %389, %397 : vector<8x32xf32>
    %406 = arith.addf %404, %405 : vector<8x32xf32>
    %407 = math.tanh %406 : vector<8x32xf32>
    %408 = arith.mulf %403, %407 : vector<8x32xf32>
    %409 = vector.extract_strided_slice %5 {offsets = [56, 0], sizes = [8, 128], strides = [1, 1]} : vector<64x128xf32> to vector<8x128xf32>
    %cst_68 = arith.constant dense<0.000000e+00> : vector<8x128xf32>
    %410 = tpu.matmul %379, %6, %cst_68 {dimension_numbers = #tpu.dot_dimension_numbers<[1], [0], [0], [1], [0, 0, 1, 1], [], []>} : vector<8x32xf32>, vector<32x128xf32>, vector<8x128xf32> -> vector<8x128xf32>
    %411 = arith.addf %409, %410 : vector<8x128xf32>
    %412 = vector.extract_strided_slice %411 {offsets = [0, 0], sizes = [8, 32], strides = [1, 1]} : vector<8x128xf32> to vector<8x32xf32>
    %413 = arith.negf %412 : vector<8x32xf32>
    %414 = math.exp %413 : vector<8x32xf32>
    %cst_69 = arith.constant 1.000000e+00 : f32
    %415 = vector.broadcast %cst_69 : f32 to vector<8x32xf32>
    %416 = arith.addf %415, %414 : vector<8x32xf32>
    %417 = arith.divf %415, %416 : vector<8x32xf32>
    %418 = vector.extract_strided_slice %411 {offsets = [0, 32], sizes = [8, 32], strides = [1, 1]} : vector<8x128xf32> to vector<8x32xf32>
    %419 = arith.negf %418 : vector<8x32xf32>
    %420 = math.exp %419 : vector<8x32xf32>
    %cst_70 = arith.constant 1.000000e+00 : f32
    %421 = vector.broadcast %cst_70 : f32 to vector<8x32xf32>
    %422 = arith.addf %421, %420 : vector<8x32xf32>
    %423 = arith.divf %421, %422 : vector<8x32xf32>
    %424 = vector.extract_strided_slice %411 {offsets = [0, 64], sizes = [8, 32], strides = [1, 1]} : vector<8x128xf32> to vector<8x32xf32>
    %425 = math.tanh %424 : vector<8x32xf32>
    %426 = vector.extract_strided_slice %411 {offsets = [0, 96], sizes = [8, 32], strides = [1, 1]} : vector<8x128xf32> to vector<8x32xf32>
    %427 = arith.negf %426 : vector<8x32xf32>
    %428 = math.exp %427 : vector<8x32xf32>
    %cst_71 = arith.constant 1.000000e+00 : f32
    %429 = vector.broadcast %cst_71 : f32 to vector<8x32xf32>
    %430 = arith.addf %429, %428 : vector<8x32xf32>
    %431 = arith.divf %429, %430 : vector<8x32xf32>
    %432 = arith.mulf %423, %377 : vector<8x32xf32>
    %433 = arith.mulf %417, %425 : vector<8x32xf32>
    %434 = arith.addf %432, %433 : vector<8x32xf32>
    %435 = math.tanh %434 : vector<8x32xf32>
    %436 = arith.mulf %431, %435 : vector<8x32xf32>
    %437 = tpu.concatenate %436, %408 in 1 : vector<8x32xf32>, vector<8x32xf32> -> vector<8x64xf32>
    %cst_72 = arith.constant dense<0.000000e+00> : vector<8x128xf32>
    %438 = tpu.matmul %437, %7, %cst_72 {dimension_numbers = #tpu.dot_dimension_numbers<[1], [0], [0], [1], [0, 0, 1, 1], [], []>} : vector<8x64xf32>, vector<64x128xf32>, vector<8x128xf32> -> vector<8x128xf32>
    %439 = vector.broadcast %8 : vector<1x128xf32> to vector<8x128xf32>
    %440 = arith.addf %438, %439 : vector<8x128xf32>
    %441 = vector.extract_strided_slice %440 {offsets = [0, 0], sizes = [8, 32], strides = [1, 1]} : vector<8x128xf32> to vector<8x32xf32>
    %442 = arith.negf %441 : vector<8x32xf32>
    %443 = math.exp %442 : vector<8x32xf32>
    %cst_73 = arith.constant 1.000000e+00 : f32
    %444 = vector.broadcast %cst_73 : f32 to vector<8x32xf32>
    %445 = arith.addf %444, %443 : vector<8x32xf32>
    %446 = arith.divf %444, %445 : vector<8x32xf32>
    %447 = vector.extract_strided_slice %440 {offsets = [0, 32], sizes = [8, 32], strides = [1, 1]} : vector<8x128xf32> to vector<8x32xf32>
    %448 = arith.negf %447 : vector<8x32xf32>
    %449 = math.exp %448 : vector<8x32xf32>
    %cst_74 = arith.constant 1.000000e+00 : f32
    %450 = vector.broadcast %cst_74 : f32 to vector<8x32xf32>
    %451 = arith.addf %450, %449 : vector<8x32xf32>
    %452 = arith.divf %450, %451 : vector<8x32xf32>
    %453 = vector.extract_strided_slice %440 {offsets = [0, 64], sizes = [8, 32], strides = [1, 1]} : vector<8x128xf32> to vector<8x32xf32>
    %454 = math.tanh %453 : vector<8x32xf32>
    %455 = vector.extract_strided_slice %440 {offsets = [0, 96], sizes = [8, 32], strides = [1, 1]} : vector<8x128xf32> to vector<8x32xf32>
    %456 = arith.negf %455 : vector<8x32xf32>
    %457 = math.exp %456 : vector<8x32xf32>
    %cst_75 = arith.constant 1.000000e+00 : f32
    %458 = vector.broadcast %cst_75 : f32 to vector<8x32xf32>
    %459 = arith.addf %458, %457 : vector<8x32xf32>
    %460 = arith.divf %458, %459 : vector<8x32xf32>
    %461 = arith.mulf %452, %406 : vector<8x32xf32>
    %462 = arith.mulf %446, %454 : vector<8x32xf32>
    %463 = arith.addf %461, %462 : vector<8x32xf32>
    %464 = math.tanh %463 : vector<8x32xf32>
    %465 = arith.mulf %460, %464 : vector<8x32xf32>
    %466 = tpu.concatenate %66, %123, %180, %237, %294, %351, %408, %465 in 0 : vector<8x32xf32>, vector<8x32xf32>, vector<8x32xf32>, vector<8x32xf32>, vector<8x32xf32>, vector<8x32xf32>, vector<8x32xf32>, vector<8x32xf32> -> vector<64x32xf32>
    %c0_76 = arith.constant 0 : index
    %c0_77 = arith.constant 0 : index
    %467 = vector.load %arg6[%c0_76, %c0_77] : memref<32x128xf32, #tpu.memory_space<vmem>>, vector<32x128xf32>
    %cst_78 = arith.constant dense<0.000000e+00> : vector<64x128xf32>
    %468 = tpu.matmul %466, %467, %cst_78 {dimension_numbers = #tpu.dot_dimension_numbers<[1], [0], [0], [1], [0, 0, 1, 1], [], []>} : vector<64x32xf32>, vector<32x128xf32>, vector<64x128xf32> -> vector<64x128xf32>
    %c0_79 = arith.constant 0 : index
    %c0_80 = arith.constant 0 : index
    %469 = vector.load %arg7[%c0_79, %c0_80] : memref<1x128xf32, #tpu.memory_space<vmem>>, vector<1x128xf32>
    %470 = vector.broadcast %469 : vector<1x128xf32> to vector<64x128xf32>
    %471 = arith.addf %468, %470 : vector<64x128xf32>
    %c0_81 = arith.constant 0 : index
    %c0_82 = arith.constant 0 : index
    %472 = vector.load %arg8[%c0_81, %c0_82] : memref<64x128xf32, #tpu.memory_space<vmem>>, vector<64x128xf32>
    tpu.vector_store %arg8[%c0_81, %c0_82], %471 {strides = array<i32>} : memref<64x128xf32, #tpu.memory_space<vmem>>, vector<64x128xf32>,
    return
  }
}

</mosaic_0001>

<llo_original>
// kernel: tpu_custom_call.1
$region0: #{tpu_custom_call.1}
  #allocation0 [shape = 'u32[]', space=smem, size = 0x4, offset = 0x4, fixed_abs, tag = 'smem constant byte address 0x4 - core index']
  #allocation1 [shape = 'u32[72,128]{1,0:T(1,128)}', space=vmem, size = 0x9000, scoped, tag = 'internal scratch']
  %s0 = inlined_call_operand.vmem [shape: f32[64,32], index: 0, kind: input, shape index: {}]
  %s1 = inlined_call_operand.vmem [shape: f32[32,128], index: 1, kind: input, shape index: {}]
  %s2 = inlined_call_operand.hbm [shape: f32[32,128], index: 2, kind: input, shape index: {}]
  %s3 = inlined_call_operand.vmem [shape: f32[1,128], index: 3, kind: input, shape index: {}]
  %s4 = inlined_call_operand.vmem [shape: f32[64,128], index: 4, kind: input, shape index: {}]
  %s5 = inlined_call_operand.vmem [shape: f32[1,128], index: 5, kind: input, shape index: {}]
  %s6 = inlined_call_operand.hbm [shape: f32[32,128], index: 6, kind: input, shape index: {}]
  %s7 = inlined_call_operand.vmem [shape: f32[1,128], index: 7, kind: input, shape index: {}]
  %s8 = inlined_call_operand.hbm [shape: f32[64,128], index: 8, kind: output, shape index: {}]
  %s9 = sld [smem:[#allocation0]]
  $region50: #{tpu_custom_call.1} parent=0
    _
  %s11 = ssub.s32 1, %s9
  %s12 = scalar_select 0, %s11, %s9
  $region1: #{tpu_custom_call.1} parent=0
    #allocation2 [shape = 'u8[16384]{0}', space=vmem, size = 0x4000, scoped, tag = 'input window, operand 2, single buffered']
    #allocation3 [shape = 's32[1]{0}', space=sflag, size = 0x4, scoped, tag = 'scoped memory for tpu_custom_call.1']
    #allocation4 [shape = 's32[1]{0}', space=sflag, size = 0x4, scoped, tag = 'scoped memory for tpu_custom_call.1']
    #allocation5 [shape = 'u8[16384]{0}', space=vmem, size = 0x4000, scoped, tag = 'input window, operand 6, single buffered']
    #allocation6 [shape = 's32[1]{0}', space=sflag, size = 0x4, scoped, tag = 'scoped memory for tpu_custom_call.1']
    #allocation7 [shape = 'u8[32768]{0}', space=vmem, size = 0x8000, scoped, tag = 'output window, operand 0, single buffered']
    %13 = vsyncpa [#allocation3], 0
    %14 = vsyncpa [#allocation6], 0
    %15 = vsyncpa [#allocation4], 0
    // Predicated region
    $region2: #{tpu_custom_call.1} parent=1 // pred_check
      _
    $region3: #{tpu_custom_call.1} parent=1 // pred_check_branch
      %17 = sbr.rel (0) target = $region5
    $region4: #{tpu_custom_call.1} parent=1 // pred_region
      _
    $region5: #{tpu_custom_call.1} parent=1 // pred_fallthru
      _
    // Predicated region
    $region6: #{tpu_custom_call.1} parent=1 // pred_check
      _
    $region7: #{tpu_custom_call.1} parent=1 // pred_check_branch
      %19 = sbr.rel (0) target = $region9
    $region8: #{tpu_custom_call.1} parent=1 // pred_region
      _
    $region9: #{tpu_custom_call.1} parent=1 // pred_fallthru
      _
    // Predicated region
    $region10: #{tpu_custom_call.1} parent=1 // pred_check
      _
    $region11: #{tpu_custom_call.1} parent=1 // pred_check_branch
      %21 = sbr.rel (0) target = $region13
    $region12: #{tpu_custom_call.1} parent=1 // pred_region
      %23 = vsyncadd [#allocation3], 0
      %s24 = sshll.u32 %s2, 4
      %s25 = int_to_ptr.hbm [resolvable:$true] %s24
      %s26 = sshll.u32 [#allocation2], 4
      %s27 = int_to_ptr.vmem [resolvable:$true] %s26
      %32 = dma.hbm_to_vmem [thread:$0]  %s25, 512, %s27, [#allocation3], 128, 128, 8
    $region13: #{tpu_custom_call.1} parent=1 // pred_fallthru
      _
    // Predicated region
    $region14: #{tpu_custom_call.1} parent=1 // pred_check
      _
    $region15: #{tpu_custom_call.1} parent=1 // pred_check_branch
      %34 = sbr.rel (0) target = $region17
    $region16: #{tpu_custom_call.1} parent=1 // pred_region
      _
    $region17: #{tpu_custom_call.1} parent=1 // pred_fallthru
      _
    // Predicated region
    $region18: #{tpu_custom_call.1} parent=1 // pred_check
      _
    $region19: #{tpu_custom_call.1} parent=1 // pred_check_branch
      %36 = sbr.rel (0) target = $region21
    $region20: #{tpu_custom_call.1} parent=1 // pred_region
      _
    $region21: #{tpu_custom_call.1} parent=1 // pred_fallthru
      _
    // Predicated region
    $region22: #{tpu_custom_call.1} parent=1 // pred_check
      _
    $region23: #{tpu_custom_call.1} parent=1 // pred_check_branch
      %38 = sbr.rel (0) target = $region25
    $region24: #{tpu_custom_call.1} parent=1 // pred_region
      _
    $region25: #{tpu_custom_call.1} parent=1 // pred_fallthru
      _
    // Predicated region
    $region26: #{tpu_custom_call.1} parent=1 // pred_check
      _
    $region27: #{tpu_custom_call.1} parent=1 // pred_check_branch
      %40 = sbr.rel (0) target = $region29
    $region28: #{tpu_custom_call.1} parent=1 // pred_region
      %42 = vsyncadd [#allocation6], 0
      %s43 = sshll.u32 %s6, 4
      %s44 = int_to_ptr.hbm [resolvable:$true] %s43
      %s45 = sshll.u32 [#allocation5], 4
      %s46 = int_to_ptr.vmem [resolvable:$true] %s45
      %51 = dma.hbm_to_vmem [thread:$0]  %s44, 512, %s46, [#allocation6], 128, 128, 8
    $region29: #{tpu_custom_call.1} parent=1 // pred_fallthru
      _
    // Predicated region
    $region30: #{tpu_custom_call.1} parent=1 // pred_check
      _
    $region31: #{tpu_custom_call.1} parent=1 // pred_check_branch
      %53 = sbr.rel (0) target = $region33
    $region32: #{tpu_custom_call.1} parent=1 // pred_region
      _
    $region33: #{tpu_custom_call.1} parent=1 // pred_fallthru
      _
    // Predicated region
    $region34: #{tpu_custom_call.1} parent=1 // pred_check
      _
    $region35: #{tpu_custom_call.1} parent=1 // pred_check_branch
      %55 = sbr.rel (0) target = $region37
    $region36: #{tpu_custom_call.1} parent=1 // pred_region
      %57 = dma.done [#allocation3], 512
    $region37: #{tpu_custom_call.1} parent=1 // pred_fallthru
      _
    // Predicated region
    $region38: #{tpu_custom_call.1} parent=1 // pred_check
      _
    $region39: #{tpu_custom_call.1} parent=1 // pred_check_branch
      %59 = sbr.rel (0) target = $region41
    $region40: #{tpu_custom_call.1} parent=1 // pred_region
      %61 = dma.done [#allocation6], 512
    $region41: #{tpu_custom_call.1} parent=1 // pred_fallthru
      _
    %v62 = vld [vmem:[%s0] sm:$0xff]
    %v63 = vld [vmem:[%s0 + $0x8] sm:$0xff]
    %v64 = vld [vmem:[%s0 + $0x10] sm:$0xff]
    %v65 = vld [vmem:[%s0 + $0x18] sm:$0xff]
    %v66 = vld [vmem:[%s0 + $0x20] sm:$0xff]
    %v67 = vld [vmem:[%s0 + $0x28] sm:$0xff]
    %v68 = vld [vmem:[%s0 + $0x30] sm:$0xff]
    %v69 = vld [vmem:[%s0 + $0x38] sm:$0xff]
    %v70 = vld [vmem:[%s1] sm:$0xff]
    %v71 = vld [vmem:[%s1 + $0x8] sm:$0xff]
    %v72 = vld [vmem:[%s1 + $0x10] sm:$0xff]
    %v73 = vld [vmem:[%s1 + $0x18] sm:$0xff]
    %v74 = vld [vmem:[%s3] sm:$0x1]
    %v76 = vperm.slane %v74, 0
    %vm78 = vcmask 261120
    %v80 = vsel %vm78, %v62, 0
    %v83 = vsel %vm78, %v63, 0
    %v86 = vsel %vm78, %v64, 0
    %v89 = vsel %vm78, %v65, 0
    %v92 = vsel %vm78, %v66, 0
    %v95 = vsel %vm78, %v67, 0
    %v98 = vsel %vm78, %v68, 0
    %v101 = vsel %vm78, %v69, 0
    %103 = vmatpush.msra.mxu0 0.0
    %104 = vmatpush.msra.mxu0 0.0
    %105 = vmatpush.msra.mxu0 0.0
    %106 = vmatpush.msra.mxu0 0.0
    %107 = vmatpush.msra.mxu0 0.0
    %108 = vmatpush.msra.mxu0 0.0
    %109 = vmatpush.msra.mxu0 0.0
    %110 = vmatpush.msra.mxu0 0.0
    %111 = vmatpush.msra.mxu0 0.0
    %112 = vmatpush.msra.mxu0 0.0
    %113 = vmatpush.msra.mxu0 0.0
    %114 = vmatpush.msra.mxu0 0.0
    %115 = vmatpush.msra.mxu0 %v73
    %116 = vmatpush.msra.mxu0 %v72
    %117 = vmatpush.msra.mxu0 %v71
    %118 = vmatpush.msra.mxu0 %v70
    %119 = vmatmul.f32.gmra.mxu0 %v80
    %v120 = vpop.f32.mrf.mxu0
    %v121 = vadd.f32 %v76, %v120
    %122 = vmatmul.f32.gmra.mxu0 %v83
    %v123 = vpop.f32.mrf.mxu0
    %v124 = vadd.f32 %v76, %v123
    %125 = vmatmul.f32.gmra.mxu0 %v86
    %v126 = vpop.f32.mrf.mxu0
    %v127 = vadd.f32 %v76, %v126
    %128 = vmatmul.f32.gmra.mxu0 %v89
    %v129 = vpop.f32.mrf.mxu0
    %v130 = vadd.f32 %v76, %v129
    %131 = vmatmul.f32.gmra.mxu0 %v92
    %v132 = vpop.f32.mrf.mxu0
    %v133 = vadd.f32 %v76, %v132
    %134 = vmatmul.f32.gmra.mxu0 %v95
    %v135 = vpop.f32.mrf.mxu0
    %v136 = vadd.f32 %v76, %v135
    %137 = vmatmul.f32.gmra.mxu0 %v98
    %v138 = vpop.f32.mrf.mxu0
    %v139 = vadd.f32 %v76, %v138
    %140 = vmatmul.f32.gmra.mxu0 %v101
    %v141 = vpop.f32.mrf.mxu0
    %v142 = vadd.f32 %v76, %v141
    %143 = vdwg.mxu0
    %v144 = vld [vmem:[#allocation2] sm:$0xff]
    %v145 = vld [vmem:[#allocation2 + $0x8] sm:$0xff]
    %v146 = vld [vmem:[#allocation2 + $0x10] sm:$0xff]
    %v147 = vld [vmem:[#allocation2 + $0x18] sm:$0xff]
    %v148 = vld [vmem:[%s4] sm:$0xff]
    %v149 = vld [vmem:[%s4 + $0x8] sm:$0xff]
    %v150 = vld [vmem:[%s4 + $0x10] sm:$0xff]
    %v151 = vld [vmem:[%s4 + $0x18] sm:$0xff]
    %v152 = vld [vmem:[%s4 + $0x20] sm:$0xff]
    %v153 = vld [vmem:[%s4 + $0x28] sm:$0xff]
    %v154 = vld [vmem:[%s4 + $0x30] sm:$0xff]
    %v155 = vld [vmem:[%s4 + $0x38] sm:$0xff]
    %v156 = vld [vmem:[%s5] sm:$0x1]
    %v158 = vsel %vm78, 0.0, 0
    %160 = vmatpush.msra.mxu0 0.0
    %161 = vmatpush.msra.mxu0 0.0
    %162 = vmatpush.msra.mxu0 0.0
    %163 = vmatpush.msra.mxu0 0.0
    %164 = vmatpush.msra.mxu0 0.0
    %165 = vmatpush.msra.mxu0 0.0
    %166 = vmatpush.msra.mxu0 0.0
    %167 = vmatpush.msra.mxu0 0.0
    %168 = vmatpush.msra.mxu0 0.0
    %169 = vmatpush.msra.mxu0 0.0
    %170 = vmatpush.msra.mxu0 0.0
    %171 = vmatpush.msra.mxu0 0.0
    %172 = vmatpush.msra.mxu0 %v147
    %173 = vmatpush.msra.mxu0 %v146
    %174 = vmatpush.msra.mxu0 %v145
    %175 = vmatpush.msra.mxu0 %v144
    %176 = vmatmul.f32.gmra.mxu0 %v158
    %v177 = vpop.f32.mrf.mxu0
    %v178 = vadd.f32 0.0, %v177
    %179 = vdwg.mxu0
    %v180 = vadd.f32 %v121, %v178
    %v181 = vxor.u32 %v180, 2147483648
    %v182 = vmul.f32 %v181, 1.442695
    %v183 = vpow.pop %v182
    %v184 = vadd.f32 %v183, 1.0
    %v185 = vrcp.pop %v184
    %v186 = vmul.f32 %v184, %v185
    %v187 = vsub.f32 1.0, %v186
    %v188 = vmul.f32 %v185, %v187
    %v189 = vadd.f32 %v185, %v188
    %vm190 = vweird.f32 %v184
    %vm191 = vweird.f32 %v185
    %vm192 = vmor %vm190, %vm191
    %v193 = vsel %vm192, %v185, %v189
    %v194 = vand.u32 2147483647, %v184
    %vm195 = vcmp.eq.f32.partialorder %v194, 8.507059e+37
    %v196 = vand.u32 %v184, 2147483648
    %v197 = vor.u32 1.1754944e-38, %v196
    %v198 = vsel %vm195, %v197, %v193
    %v199 = vmul.f32 1.0, %v198
    %v200 = vtanh.pop %v180
    %v201 = vmul.f32 %v199, 0.0
    %203 = vrot.lane.b32.xlu0 %v200, 64
    %v204 = vpop.permute.xlu0 %203
    %v206 = vmul.f32 %v199, %v204
    %208 = vrot.lane.b32.xlu0 %v206, 32
    %v209 = vpop.permute.xlu0 %208
    %v211 = vadd.f32 %v201, %v209
    %v212 = vtanh.pop %v211
    %214 = vrot.lane.b32.xlu0 %v212, 64
    %v215 = vpop.permute.xlu0 %214
    %v217 = vmul.f32 %v199, %v215
    %219 = vrot.lane.b32.xlu0 %v217, 32
    %v220 = vpop.permute.xlu0 %219
    %v222 = vsel %vm78, %v220, 0.0
    %v224 = vperm.slane %v156, 0
    %vm226 = vcmask 523264
    %v228 = vsel %vm226, %v222, 0
    %230 = vmatpush.msra.mxu0 0.0
    %231 = vmatpush.msra.mxu0 0.0
    %232 = vmatpush.msra.mxu0 0.0
    %233 = vmatpush.msra.mxu0 0.0
    %234 = vmatpush.msra.mxu0 0.0
    %235 = vmatpush.msra.mxu0 0.0
    %236 = vmatpush.msra.mxu0 0.0
    %237 = vmatpush.msra.mxu0 0.0
    %238 = vmatpush.msra.mxu0 %v155
    %239 = vmatpush.msra.mxu0 %v154
    %240 = vmatpush.msra.mxu0 %v153
    %241 = vmatpush.msra.mxu0 %v152
    %242 = vmatpush.msra.mxu0 %v151
    %243 = vmatpush.msra.mxu0 %v150
    %244 = vmatpush.msra.mxu0 %v149
    %245 = vmatpush.msra.mxu0 %v148
    %246 = vmatmul.f32.gmra.mxu0 %v228
    %v247 = vpop.f32.mrf.mxu0
    %v248 = vadd.f32 %v224, %v247
    %249 = vdwg.mxu0
    %v250 = vxor.u32 %v248, 2147483648
    %v251 = vmul.f32 %v250, 1.442695
    %v252 = vpow.pop %v251
    %v253 = vadd.f32 %v252, 1.0
    %v254 = vrcp.pop %v253
    %v255 = vmul.f32 %v253, %v254
    %v256 = vsub.f32 1.0, %v255
    %v257 = vmul.f32 %v254, %v256
    %v258 = vadd.f32 %v254, %v257
    %vm259 = vweird.f32 %v253
    %vm260 = vweird.f32 %v254
    %vm261 = vmor %vm259, %vm260
    %v262 = vsel %vm261, %v254, %v258
    %v263 = vand.u32 2147483647, %v253
    %vm264 = vcmp.eq.f32.partialorder %v263, 8.507059e+37
    %v265 = vand.u32 %v253, 2147483648
    %v266 = vor.u32 1.1754944e-38, %v265
    %v267 = vsel %vm264, %v266, %v262
    %v268 = vmul.f32 1.0, %v267
    %v269 = vtanh.pop %v248
    %v270 = vmul.f32 %v268, 0.0
    %272 = vrot.lane.b32.xlu0 %v269, 64
    %v273 = vpop.permute.xlu0 %272
    %v275 = vmul.f32 %v268, %v273
    %277 = vrot.lane.b32.xlu0 %v275, 32
    %v278 = vpop.permute.xlu0 %277
    %v280 = vadd.f32 %v270, %v278
    %v281 = vtanh.pop %v280
    %283 = vrot.lane.b32.xlu0 %v281, 64
    %v284 = vpop.permute.xlu0 %283
    %v286 = vmul.f32 %v268, %v284
    %v287 = vsel %vm78, %v220, 0
    %289 = vmatpush.msra.mxu0 0.0
    %290 = vmatpush.msra.mxu0 0.0
    %291 = vmatpush.msra.mxu0 0.0
    %292 = vmatpush.msra.mxu0 0.0
    %293 = vmatpush.msra.mxu0 0.0
    %294 = vmatpush.msra.mxu0 0.0
    %295 = vmatpush.msra.mxu0 0.0
    %296 = vmatpush.msra.mxu0 0.0
    %297 = vmatpush.msra.mxu0 0.0
    %298 = vmatpush.msra.mxu0 0.0
    %299 = vmatpush.msra.mxu0 0.0
    %300 = vmatpush.msra.mxu0 0.0
    %301 = vmatpush.msra.mxu0 %v147
    %302 = vmatpush.msra.mxu0 %v146
    %303 = vmatpush.msra.mxu0 %v145
    %304 = vmatpush.msra.mxu0 %v144
    %305 = vmatmul.f32.gmra.mxu0 %v287
    %v306 = vpop.f32.mrf.mxu0
    %v307 = vadd.f32 0.0, %v306
    %308 = vdwg.mxu0
    %v309 = vadd.f32 %v124, %v307
    %v310 = vxor.u32 %v309, 2147483648
    %v311 = vmul.f32 %v310, 1.442695
    %v312 = vpow.pop %v311
    %v313 = vadd.f32 %v312, 1.0
    %v314 = vrcp.pop %v313
    %v315 = vmul.f32 %v313, %v314
    %v316 = vsub.f32 1.0, %v315
    %v317 = vmul.f32 %v314, %v316
    %v318 = vadd.f32 %v314, %v317
    %vm319 = vweird.f32 %v313
    %vm320 = vweird.f32 %v314
    %vm321 = vmor %vm319, %vm320
    %v322 = vsel %vm321, %v314, %v318
    %v323 = vand.u32 2147483647, %v313
    %vm324 = vcmp.eq.f32.partialorder %v323, 8.507059e+37
    %v325 = vand.u32 %v313, 2147483648
    %v326 = vor.u32 1.1754944e-38, %v325
    %v327 = vsel %vm324, %v326, %v322
    %v328 = vmul.f32 1.0, %v327
    %v329 = vtanh.pop %v309
    %v330 = vmul.f32 %v328, %v211
    %332 = vrot.lane.b32.xlu0 %v329, 64
    %v333 = vpop.permute.xlu0 %332
    %v335 = vmul.f32 %v328, %v333
    %337 = vrot.lane.b32.xlu0 %v335, 32
    %v338 = vpop.permute.xlu0 %337
    %v340 = vadd.f32 %v330, %v338
    %v341 = vtanh.pop %v340
    %343 = vrot.lane.b32.xlu0 %v341, 64
    %v344 = vpop.permute.xlu0 %343
    %v346 = vmul.f32 %v328, %v344
    %348 = vrot.lane.b32.xlu0 %v346, 32
    %v349 = vpop.permute.xlu0 %348
    %352 = vrot.lane.b32.xlu0 %v286, 64
    %v353 = vpop.permute.xlu0 %352
    %v355 = vsel %vm78, %v349, %v353
    %v357 = vsel %vm226, %v355, 0
    %359 = vmatpush.msra.mxu0 0.0
    %360 = vmatpush.msra.mxu0 0.0
    %361 = vmatpush.msra.mxu0 0.0
    %362 = vmatpush.msra.mxu0 0.0
    %363 = vmatpush.msra.mxu0 0.0
    %364 = vmatpush.msra.mxu0 0.0
    %365 = vmatpush.msra.mxu0 0.0
    %366 = vmatpush.msra.mxu0 0.0
    %367 = vmatpush.msra.mxu0 %v155
    %368 = vmatpush.msra.mxu0 %v154
    %369 = vmatpush.msra.mxu0 %v153
    %370 = vmatpush.msra.mxu0 %v152
    %371 = vmatpush.msra.mxu0 %v151
    %372 = vmatpush.msra.mxu0 %v150
    %373 = vmatpush.msra.mxu0 %v149
    %374 = vmatpush.msra.mxu0 %v148
    %375 = vmatmul.f32.gmra.mxu0 %v357
    %v376 = vpop.f32.mrf.mxu0
    %v377 = vadd.f32 %v224, %v376
    %378 = vdwg.mxu0
    %v379 = vxor.u32 %v377, 2147483648
    %v380 = vmul.f32 %v379, 1.442695
    %v381 = vpow.pop %v380
    %v382 = vadd.f32 %v381, 1.0
    %v383 = vrcp.pop %v382
    %v384 = vmul.f32 %v382, %v383
    %v385 = vsub.f32 1.0, %v384
    %v386 = vmul.f32 %v383, %v385
    %v387 = vadd.f32 %v383, %v386
    %vm388 = vweird.f32 %v382
    %vm389 = vweird.f32 %v383
    %vm390 = vmor %vm388, %vm389
    %v391 = vsel %vm390, %v383, %v387
    %v392 = vand.u32 2147483647, %v382
    %vm393 = vcmp.eq.f32.partialorder %v392, 8.507059e+37
    %v394 = vand.u32 %v382, 2147483648
    %v395 = vor.u32 1.1754944e-38, %v394
    %v396 = vsel %vm393, %v395, %v391
    %v397 = vmul.f32 1.0, %v396
    %v398 = vtanh.pop %v377
    %v399 = vmul.f32 %v397, %v280
    %401 = vrot.lane.b32.xlu0 %v398, 64
    %v402 = vpop.permute.xlu0 %401
    %v404 = vmul.f32 %v397, %v402
    %406 = vrot.lane.b32.xlu0 %v404, 32
    %v407 = vpop.permute.xlu0 %406
    %v409 = vadd.f32 %v399, %v407
    %v410 = vtanh.pop %v409
    %412 = vrot.lane.b32.xlu0 %v410, 64
    %v413 = vpop.permute.xlu0 %412
    %v415 = vmul.f32 %v397, %v413
    %v416 = vsel %vm78, %v349, 0
    %418 = vmatpush.msra.mxu0 0.0
    %419 = vmatpush.msra.mxu0 0.0
    %420 = vmatpush.msra.mxu0 0.0
    %421 = vmatpush.msra.mxu0 0.0
    %422 = vmatpush.msra.mxu0 0.0
    %423 = vmatpush.msra.mxu0 0.0
    %424 = vmatpush.msra.mxu0 0.0
    %425 = vmatpush.msra.mxu0 0.0
    %426 = vmatpush.msra.mxu0 0.0
    %427 = vmatpush.msra.mxu0 0.0
    %428 = vmatpush.msra.mxu0 0.0
    %429 = vmatpush.msra.mxu0 0.0
    %430 = vmatpush.msra.mxu0 %v147
    %431 = vmatpush.msra.mxu0 %v146
    %432 = vmatpush.msra.mxu0 %v145
    %433 = vmatpush.msra.mxu0 %v144
    %434 = vmatmul.f32.gmra.mxu0 %v416
    %v435 = vpop.f32.mrf.mxu0
    %v436 = vadd.f32 0.0, %v435
    %437 = vdwg.mxu0
    %v438 = vadd.f32 %v127, %v436
    %v439 = vxor.u32 %v438, 2147483648
    %v440 = vmul.f32 %v439, 1.442695
    %v441 = vpow.pop %v440
    %v442 = vadd.f32 %v441, 1.0
    %v443 = vrcp.pop %v442
    %v444 = vmul.f32 %v442, %v443
    %v445 = vsub.f32 1.0, %v444
    %v446 = vmul.f32 %v443, %v445
    %v447 = vadd.f32 %v443, %v446
    %vm448 = vweird.f32 %v442
    %vm449 = vweird.f32 %v443
    %vm450 = vmor %vm448, %vm449
    %v451 = vsel %vm450, %v443, %v447
    %v452 = vand.u32 2147483647, %v442
    %vm453 = vcmp.eq.f32.partialorder %v452, 8.507059e+37
    %v454 = vand.u32 %v442, 2147483648
    %v455 = vor.u32 1.1754944e-38, %v454
    %v456 = vsel %vm453, %v455, %v451
    %v457 = vmul.f32 1.0, %v456
    %v458 = vtanh.pop %v438
    %v459 = vmul.f32 %v457, %v340
    %461 = vrot.lane.b32.xlu0 %v458, 64
    %v462 = vpop.permute.xlu0 %461
    %v464 = vmul.f32 %v457, %v462
    %466 = vrot.lane.b32.xlu0 %v464, 32
    %v467 = vpop.permute.xlu0 %466
    %v469 = vadd.f32 %v459, %v467
    %v470 = vtanh.pop %v469
    %472 = vrot.lane.b32.xlu0 %v470, 64
    %v473 = vpop.permute.xlu0 %472
    %v475 = vmul.f32 %v457, %v473
    %477 = vrot.lane.b32.xlu0 %v475, 32
    %v478 = vpop.permute.xlu0 %477
    %481 = vrot.lane.b32.xlu0 %v415, 64
    %v482 = vpop.permute.xlu0 %481
    %v484 = vsel %vm78, %v478, %v482
    %v486 = vsel %vm226, %v484, 0
    %488 = vmatpush.msra.mxu0 0.0
    %489 = vmatpush.msra.mxu0 0.0
    %490 = vmatpush.msra.mxu0 0.0
    %491 = vmatpush.msra.mxu0 0.0
    %492 = vmatpush.msra.mxu0 0.0
    %493 = vmatpush.msra.mxu0 0.0
    %494 = vmatpush.msra.mxu0 0.0
    %495 = vmatpush.msra.mxu0 0.0
    %496 = vmatpush.msra.mxu0 %v155
    %497 = vmatpush.msra.mxu0 %v154
    %498 = vmatpush.msra.mxu0 %v153
    %499 = vmatpush.msra.mxu0 %v152
    %500 = vmatpush.msra.mxu0 %v151
    %501 = vmatpush.msra.mxu0 %v150
    %502 = vmatpush.msra.mxu0 %v149
    %503 = vmatpush.msra.mxu0 %v148
    %504 = vmatmul.f32.gmra.mxu0 %v486
    %v505 = vpop.f32.mrf.mxu0
    %v506 = vadd.f32 %v224, %v505
    %507 = vdwg.mxu0
    %v508 = vxor.u32 %v506, 2147483648
    %v509 = vmul.f32 %v508, 1.442695
    %v510 = vpow.pop %v509
    %v511 = vadd.f32 %v510, 1.0
    %v512 = vrcp.pop %v511
    %v513 = vmul.f32 %v511, %v512
    %v514 = vsub.f32 1.0, %v513
    %v515 = vmul.f32 %v512, %v514
    %v516 = vadd.f32 %v512, %v515
    %vm517 = vweird.f32 %v511
    %vm518 = vweird.f32 %v512
    %vm519 = vmor %vm517, %vm518
    %v520 = vsel %vm519, %v512, %v516
    %v521 = vand.u32 2147483647, %v511
    %vm522 = vcmp.eq.f32.partialorder %v521, 8.507059e+37
    %v523 = vand.u32 %v511, 2147483648
    %v524 = vor.u32 1.1754944e-38, %v523
    %v525 = vsel %vm522, %v524, %v520
    %v526 = vmul.f32 1.0, %v525
    %v527 = vtanh.pop %v506
    %v528 = vmul.f32 %v526, %v409
    %530 = vrot.lane.b32.xlu0 %v527, 64
    %v531 = vpop.permute.xlu0 %530
    %v533 = vmul.f32 %v526, %v531
    %535 = vrot.lane.b32.xlu0 %v533, 32
    %v536 = vpop.permute.xlu0 %535
    %v538 = vadd.f32 %v528, %v536
    %v539 = vtanh.pop %v538
    %541 = vrot.lane.b32.xlu0 %v539, 64
    %v542 = vpop.permute.xlu0 %541
    %v544 = vmul.f32 %v526, %v542
    %v545 = vsel %vm78, %v478, 0
    %547 = vmatpush.msra.mxu0 0.0
    %548 = vmatpush.msra.mxu0 0.0
    %549 = vmatpush.msra.mxu0 0.0
    %550 = vmatpush.msra.mxu0 0.0
    %551 = vmatpush.msra.mxu0 0.0
    %552 = vmatpush.msra.mxu0 0.0
    %553 = vmatpush.msra.mxu0 0.0
    %554 = vmatpush.msra.mxu0 0.0
    %555 = vmatpush.msra.mxu0 0.0
    %556 = vmatpush.msra.mxu0 0.0
    %557 = vmatpush.msra.mxu0 0.0
    %558 = vmatpush.msra.mxu0 0.0
    %559 = vmatpush.msra.mxu0 %v147
    %560 = vmatpush.msra.mxu0 %v146
    %561 = vmatpush.msra.mxu0 %v145
    %562 = vmatpush.msra.mxu0 %v144
    %563 = vmatmul.f32.gmra.mxu0 %v545
    %v564 = vpop.f32.mrf.mxu0
    %v565 = vadd.f32 0.0, %v564
    %566 = vdwg.mxu0
    %v567 = vadd.f32 %v130, %v565
    %v568 = vxor.u32 %v567, 2147483648
    %v569 = vmul.f32 %v568, 1.442695
    %v570 = vpow.pop %v569
    %v571 = vadd.f32 %v570, 1.0
    %v572 = vrcp.pop %v571
    %v573 = vmul.f32 %v571, %v572
    %v574 = vsub.f32 1.0, %v573
    %v575 = vmul.f32 %v572, %v574
    %v576 = vadd.f32 %v572, %v575
    %vm577 = vweird.f32 %v571
    %vm578 = vweird.f32 %v572
    %vm579 = vmor %vm577, %vm578
    %v580 = vsel %vm579, %v572, %v576
    %v581 = vand.u32 2147483647, %v571
    %vm582 = vcmp.eq.f32.partialorder %v581, 8.507059e+37
    %v583 = vand.u32 %v571, 2147483648
    %v584 = vor.u32 1.1754944e-38, %v583
    %v585 = vsel %vm582, %v584, %v580
    %v586 = vmul.f32 1.0, %v585
    %v587 = vtanh.pop %v567
    %v588 = vmul.f32 %v586, %v469
    %590 = vrot.lane.b32.xlu0 %v587, 64
    %v591 = vpop.permute.xlu0 %590
    %v593 = vmul.f32 %v586, %v591
    %595 = vrot.lane.b32.xlu0 %v593, 32
    %v596 = vpop.permute.xlu0 %595
    %v598 = vadd.f32 %v588, %v596
    %v599 = vtanh.pop %v598
    %601 = vrot.lane.b32.xlu0 %v599, 64
    %v602 = vpop.permute.xlu0 %601
    %v604 = vmul.f32 %v586, %v602
    %606 = vrot.lane.b32.xlu0 %v604, 32
    %v607 = vpop.permute.xlu0 %606
    %610 = vrot.lane.b32.xlu0 %v544, 64
    %v611 = vpop.permute.xlu0 %610
    %v613 = vsel %vm78, %v607, %v611
    %v615 = vsel %vm226, %v613, 0
    %617 = vmatpush.msra.mxu0 0.0
    %618 = vmatpush.msra.mxu0 0.0
    %619 = vmatpush.msra.mxu0 0.0
    %620 = vmatpush.msra.mxu0 0.0
    %621 = vmatpush.msra.mxu0 0.0
    %622 = vmatpush.msra.mxu0 0.0
    %623 = vmatpush.msra.mxu0 0.0
    %624 = vmatpush.msra.mxu0 0.0
    %625 = vmatpush.msra.mxu0 %v155
    %626 = vmatpush.msra.mxu0 %v154
    %627 = vmatpush.msra.mxu0 %v153
    %628 = vmatpush.msra.mxu0 %v152
    %629 = vmatpush.msra.mxu0 %v151
    %630 = vmatpush.msra.mxu0 %v150
    %631 = vmatpush.msra.mxu0 %v149
    %632 = vmatpush.msra.mxu0 %v148
    %633 = vmatmul.f32.gmra.mxu0 %v615
    %v634 = vpop.f32.mrf.mxu0
    %v635 = vadd.f32 %v224, %v634
    %636 = vdwg.mxu0
    %v637 = vxor.u32 %v635, 2147483648
    %v638 = vmul.f32 %v637, 1.442695
    %v639 = vpow.pop %v638
    %v640 = vadd.f32 %v639, 1.0
    %v641 = vrcp.pop %v640
    %v642 = vmul.f32 %v640, %v641
    %v643 = vsub.f32 1.0, %v642
    %v644 = vmul.f32 %v641, %v643
    %v645 = vadd.f32 %v641, %v644
    %vm646 = vweird.f32 %v640
    %vm647 = vweird.f32 %v641
    %vm648 = vmor %vm646, %vm647
    %v649 = vsel %vm648, %v641, %v645
    %v650 = vand.u32 2147483647, %v640
    %vm651 = vcmp.eq.f32.partialorder %v650, 8.507059e+37
    %v652 = vand.u32 %v640, 2147483648
    %v653 = vor.u32 1.1754944e-38, %v652
    %v654 = vsel %vm651, %v653, %v649
    %v655 = vmul.f32 1.0, %v654
    %v656 = vtanh.pop %v635
    %v657 = vmul.f32 %v655, %v538
    %659 = vrot.lane.b32.xlu0 %v656, 64
    %v660 = vpop.permute.xlu0 %659
    %v662 = vmul.f32 %v655, %v660
    %664 = vrot.lane.b32.xlu0 %v662, 32
    %v665 = vpop.permute.xlu0 %664
    %v667 = vadd.f32 %v657, %v665
    %v668 = vtanh.pop %v667
    %670 = vrot.lane.b32.xlu0 %v668, 64
    %v671 = vpop.permute.xlu0 %670
    %v673 = vmul.f32 %v655, %v671
    %v674 = vsel %vm78, %v607, 0
    %676 = vmatpush.msra.mxu0 0.0
    %677 = vmatpush.msra.mxu0 0.0
    %678 = vmatpush.msra.mxu0 0.0
    %679 = vmatpush.msra.mxu0 0.0
    %680 = vmatpush.msra.mxu0 0.0
    %681 = vmatpush.msra.mxu0 0.0
    %682 = vmatpush.msra.mxu0 0.0
    %683 = vmatpush.msra.mxu0 0.0
    %684 = vmatpush.msra.mxu0 0.0
    %685 = vmatpush.msra.mxu0 0.0
    %686 = vmatpush.msra.mxu0 0.0
    %687 = vmatpush.msra.mxu0 0.0
    %688 = vmatpush.msra.mxu0 %v147
    %689 = vmatpush.msra.mxu0 %v146
    %690 = vmatpush.msra.mxu0 %v145
    %691 = vmatpush.msra.mxu0 %v144
    %692 = vmatmul.f32.gmra.mxu0 %v674
    %v693 = vpop.f32.mrf.mxu0
    %v694 = vadd.f32 0.0, %v693
    %695 = vdwg.mxu0
    %v696 = vadd.f32 %v133, %v694
    %v697 = vxor.u32 %v696, 2147483648
    %v698 = vmul.f32 %v697, 1.442695
    %v699 = vpow.pop %v698
    %v700 = vadd.f32 %v699, 1.0
    %v701 = vrcp.pop %v700
    %v702 = vmul.f32 %v700, %v701
    %v703 = vsub.f32 1.0, %v702
    %v704 = vmul.f32 %v701, %v703
    %v705 = vadd.f32 %v701, %v704
    %vm706 = vweird.f32 %v700
    %vm707 = vweird.f32 %v701
    %vm708 = vmor %vm706, %vm707
    %v709 = vsel %vm708, %v701, %v705
    %v710 = vand.u32 2147483647, %v700
    %vm711 = vcmp.eq.f32.partialorder %v710, 8.507059e+37
    %v712 = vand.u32 %v700, 2147483648
    %v713 = vor.u32 1.1754944e-38, %v712
    %v714 = vsel %vm711, %v713, %v709
    %v715 = vmul.f32 1.0, %v714
    %v716 = vtanh.pop %v696
    %v717 = vmul.f32 %v715, %v598
    %719 = vrot.lane.b32.xlu0 %v716, 64
    %v720 = vpop.permute.xlu0 %719
    %v722 = vmul.f32 %v715, %v720
    %724 = vrot.lane.b32.xlu0 %v722, 32
    %v725 = vpop.permute.xlu0 %724
    %v727 = vadd.f32 %v717, %v725
    %v728 = vtanh.pop %v727
    %730 = vrot.lane.b32.xlu0 %v728, 64
    %v731 = vpop.permute.xlu0 %730
    %v733 = vmul.f32 %v715, %v731
    %735 = vrot.lane.b32.xlu0 %v733, 32
    %v736 = vpop.permute.xlu0 %735
    %739 = vrot.lane.b32.xlu0 %v673, 64
    %v740 = vpop.permute.xlu0 %739
    %v742 = vsel %vm78, %v736, %v740
    %v744 = vsel %vm226, %v742, 0
    %746 = vmatpush.msra.mxu0 0.0
    %747 = vmatpush.msra.mxu0 0.0
    %748 = vmatpush.msra.mxu0 0.0
    %749 = vmatpush.msra.mxu0 0.0
    %750 = vmatpush.msra.mxu0 0.0
    %751 = vmatpush.msra.mxu0 0.0
    %752 = vmatpush.msra.mxu0 0.0
    %753 = vmatpush.msra.mxu0 0.0
    %754 = vmatpush.msra.mxu0 %v155
    %755 = vmatpush.msra.mxu0 %v154
    %756 = vmatpush.msra.mxu0 %v153
    %757 = vmatpush.msra.mxu0 %v152
    %758 = vmatpush.msra.mxu0 %v151
    %759 = vmatpush.msra.mxu0 %v150
    %760 = vmatpush.msra.mxu0 %v149
    %761 = vmatpush.msra.mxu0 %v148
    %762 = vmatmul.f32.gmra.mxu0 %v744
    %v763 = vpop.f32.mrf.mxu0
    %v764 = vadd.f32 %v224, %v763
    %765 = vdwg.mxu0
    %v766 = vxor.u32 %v764, 2147483648
    %v767 = vmul.f32 %v766, 1.442695
    %v768 = vpow.pop %v767
    %v769 = vadd.f32 %v768, 1.0
    %v770 = vrcp.pop %v769
    %v771 = vmul.f32 %v769, %v770
    %v772 = vsub.f32 1.0, %v771
    %v773 = vmul.f32 %v770, %v772
    %v774 = vadd.f32 %v770, %v773
    %vm775 = vweird.f32 %v769
    %vm776 = vweird.f32 %v770
    %vm777 = vmor %vm775, %vm776
    %v778 = vsel %vm777, %v770, %v774
    %v779 = vand.u32 2147483647, %v769
    %vm780 = vcmp.eq.f32.partialorder %v779, 8.507059e+37
    %v781 = vand.u32 %v769, 2147483648
    %v782 = vor.u32 1.1754944e-38, %v781
    %v783 = vsel %vm780, %v782, %v778
    %v784 = vmul.f32 1.0, %v783
    %v785 = vtanh.pop %v764
    %v786 = vmul.f32 %v784, %v667
    %788 = vrot.lane.b32.xlu0 %v785, 64
    %v789 = vpop.permute.xlu0 %788
    %v791 = vmul.f32 %v784, %v789
    %793 = vrot.lane.b32.xlu0 %v791, 32
    %v794 = vpop.permute.xlu0 %793
    %v796 = vadd.f32 %v786, %v794
    %v797 = vtanh.pop %v796
    %799 = vrot.lane.b32.xlu0 %v797, 64
    %v800 = vpop.permute.xlu0 %799
    %v802 = vmul.f32 %v784, %v800
    %v803 = vsel %vm78, %v736, 0
    %805 = vmatpush.msra.mxu0 0.0
    %806 = vmatpush.msra.mxu0 0.0
    %807 = vmatpush.msra.mxu0 0.0
    %808 = vmatpush.msra.mxu0 0.0
    %809 = vmatpush.msra.mxu0 0.0
    %810 = vmatpush.msra.mxu0 0.0
    %811 = vmatpush.msra.mxu0 0.0
    %812 = vmatpush.msra.mxu0 0.0
    %813 = vmatpush.msra.mxu0 0.0
    %814 = vmatpush.msra.mxu0 0.0
    %815 = vmatpush.msra.mxu0 0.0
    %816 = vmatpush.msra.mxu0 0.0
    %817 = vmatpush.msra.mxu0 %v147
    %818 = vmatpush.msra.mxu0 %v146
    %819 = vmatpush.msra.mxu0 %v145
    %820 = vmatpush.msra.mxu0 %v144
    %821 = vmatmul.f32.gmra.mxu0 %v803
    %v822 = vpop.f32.mrf.mxu0
    %v823 = vadd.f32 0.0, %v822
    %824 = vdwg.mxu0
    %v825 = vadd.f32 %v136, %v823
    %v826 = vxor.u32 %v825, 2147483648
    %v827 = vmul.f32 %v826, 1.442695
    %v828 = vpow.pop %v827
    %v829 = vadd.f32 %v828, 1.0
    %v830 = vrcp.pop %v829
    %v831 = vmul.f32 %v829, %v830
    %v832 = vsub.f32 1.0, %v831
    %v833 = vmul.f32 %v830, %v832
    %v834 = vadd.f32 %v830, %v833
    %vm835 = vweird.f32 %v829
    %vm836 = vweird.f32 %v830
    %vm837 = vmor %vm835, %vm836
    %v838 = vsel %vm837, %v830, %v834
    %v839 = vand.u32 2147483647, %v829
    %vm840 = vcmp.eq.f32.partialorder %v839, 8.507059e+37
    %v841 = vand.u32 %v829, 2147483648
    %v842 = vor.u32 1.1754944e-38, %v841
    %v843 = vsel %vm840, %v842, %v838
    %v844 = vmul.f32 1.0, %v843
    %v845 = vtanh.pop %v825
    %v846 = vmul.f32 %v844, %v727
    %848 = vrot.lane.b32.xlu0 %v845, 64
    %v849 = vpop.permute.xlu0 %848
    %v851 = vmul.f32 %v844, %v849
    %853 = vrot.lane.b32.xlu0 %v851, 32
    %v854 = vpop.permute.xlu0 %853
    %v856 = vadd.f32 %v846, %v854
    %v857 = vtanh.pop %v856
    %859 = vrot.lane.b32.xlu0 %v857, 64
    %v860 = vpop.permute.xlu0 %859
    %v862 = vmul.f32 %v844, %v860
    %864 = vrot.lane.b32.xlu0 %v862, 32
    %v865 = vpop.permute.xlu0 %864
    %868 = vrot.lane.b32.xlu0 %v802, 64
    %v869 = vpop.permute.xlu0 %868
    %v871 = vsel %vm78, %v865, %v869
    %v873 = vsel %vm226, %v871, 0
    %875 = vmatpush.msra.mxu0 0.0
    %876 = vmatpush.msra.mxu0 0.0
    %877 = vmatpush.msra.mxu0 0.0
    %878 = vmatpush.msra.mxu0 0.0
    %879 = vmatpush.msra.mxu0 0.0
    %880 = vmatpush.msra.mxu0 0.0
    %881 = vmatpush.msra.mxu0 0.0
    %882 = vmatpush.msra.mxu0 0.0
    %883 = vmatpush.msra.mxu0 %v155
    %884 = vmatpush.msra.mxu0 %v154
    %885 = vmatpush.msra.mxu0 %v153
    %886 = vmatpush.msra.mxu0 %v152
    %887 = vmatpush.msra.mxu0 %v151
    %888 = vmatpush.msra.mxu0 %v150
    %889 = vmatpush.msra.mxu0 %v149
    %890 = vmatpush.msra.mxu0 %v148
    %891 = vmatmul.f32.gmra.mxu0 %v873
    %v892 = vpop.f32.mrf.mxu0
    %v893 = vadd.f32 %v224, %v892
    %894 = vdwg.mxu0
    %v895 = vxor.u32 %v893, 2147483648
    %v896 = vmul.f32 %v895, 1.442695
    %v897 = vpow.pop %v896
    %v898 = vadd.f32 %v897, 1.0
    %v899 = vrcp.pop %v898
    %v900 = vmul.f32 %v898, %v899
    %v901 = vsub.f32 1.0, %v900
    %v902 = vmul.f32 %v899, %v901
    %v903 = vadd.f32 %v899, %v902
    %vm904 = vweird.f32 %v898
    %vm905 = vweird.f32 %v899
    %vm906 = vmor %vm904, %vm905
    %v907 = vsel %vm906, %v899, %v903
    %v908 = vand.u32 2147483647, %v898
    %vm909 = vcmp.eq.f32.partialorder %v908, 8.507059e+37
    %v910 = vand.u32 %v898, 2147483648
    %v911 = vor.u32 1.1754944e-38, %v910
    %v912 = vsel %vm909, %v911, %v907
    %v913 = vmul.f32 1.0, %v912
    %v914 = vtanh.pop %v893
    %v915 = vmul.f32 %v913, %v796
    %917 = vrot.lane.b32.xlu0 %v914, 64
    %v918 = vpop.permute.xlu0 %917
    %v920 = vmul.f32 %v913, %v918
    %922 = vrot.lane.b32.xlu0 %v920, 32
    %v923 = vpop.permute.xlu0 %922
    %v925 = vadd.f32 %v915, %v923
    %v926 = vtanh.pop %v925
    %928 = vrot.lane.b32.xlu0 %v926, 64
    %v929 = vpop.permute.xlu0 %928
    %v931 = vmul.f32 %v913, %v929
    %v932 = vsel %vm78, %v865, 0
    %934 = vmatpush.msra.mxu0 0.0
    %935 = vmatpush.msra.mxu0 0.0
    %936 = vmatpush.msra.mxu0 0.0
    %937 = vmatpush.msra.mxu0 0.0
    %938 = vmatpush.msra.mxu0 0.0
    %939 = vmatpush.msra.mxu0 0.0
    %940 = vmatpush.msra.mxu0 0.0
    %941 = vmatpush.msra.mxu0 0.0
    %942 = vmatpush.msra.mxu0 0.0
    %943 = vmatpush.msra.mxu0 0.0
    %944 = vmatpush.msra.mxu0 0.0
    %945 = vmatpush.msra.mxu0 0.0
    %946 = vmatpush.msra.mxu0 %v147
    %947 = vmatpush.msra.mxu0 %v146
    %948 = vmatpush.msra.mxu0 %v145
    %949 = vmatpush.msra.mxu0 %v144
    %950 = vmatmul.f32.gmra.mxu0 %v932
    %v951 = vpop.f32.mrf.mxu0
    %v952 = vadd.f32 0.0, %v951
    %953 = vdwg.mxu0
    %v954 = vadd.f32 %v139, %v952
    %v955 = vxor.u32 %v954, 2147483648
    %v956 = vmul.f32 %v955, 1.442695
    %v957 = vpow.pop %v956
    %v958 = vadd.f32 %v957, 1.0
    %v959 = vrcp.pop %v958
    %v960 = vmul.f32 %v958, %v959
    %v961 = vsub.f32 1.0, %v960
    %v962 = vmul.f32 %v959, %v961
    %v963 = vadd.f32 %v959, %v962
    %vm964 = vweird.f32 %v958
    %vm965 = vweird.f32 %v959
    %vm966 = vmor %vm964, %vm965
    %v967 = vsel %vm966, %v959, %v963
    %v968 = vand.u32 2147483647, %v958
    %vm969 = vcmp.eq.f32.partialorder %v968, 8.507059e+37
    %v970 = vand.u32 %v958, 2147483648
    %v971 = vor.u32 1.1754944e-38, %v970
    %v972 = vsel %vm969, %v971, %v967
    %v973 = vmul.f32 1.0, %v972
    %v974 = vtanh.pop %v954
    %v975 = vmul.f32 %v973, %v856
    %977 = vrot.lane.b32.xlu0 %v974, 64
    %v978 = vpop.permute.xlu0 %977
    %v980 = vmul.f32 %v973, %v978
    %982 = vrot.lane.b32.xlu0 %v980, 32
    %v983 = vpop.permute.xlu0 %982
    %v985 = vadd.f32 %v975, %v983
    %v986 = vtanh.pop %v985
    %988 = vrot.lane.b32.xlu0 %v986, 64
    %v989 = vpop.permute.xlu0 %988
    %v991 = vmul.f32 %v973, %v989
    %993 = vrot.lane.b32.xlu0 %v991, 32
    %v994 = vpop.permute.xlu0 %993
    %997 = vrot.lane.b32.xlu0 %v931, 64
    %v998 = vpop.permute.xlu0 %997
    %v1000 = vsel %vm78, %v994, %v998
    %v1002 = vsel %vm226, %v1000, 0
    %1004 = vmatpush.msra.mxu0 0.0
    %1005 = vmatpush.msra.mxu0 0.0
    %1006 = vmatpush.msra.mxu0 0.0
    %1007 = vmatpush.msra.mxu0 0.0
    %1008 = vmatpush.msra.mxu0 0.0
    %1009 = vmatpush.msra.mxu0 0.0
    %1010 = vmatpush.msra.mxu0 0.0
    %1011 = vmatpush.msra.mxu0 0.0
    %1012 = vmatpush.msra.mxu0 %v155
    %1013 = vmatpush.msra.mxu0 %v154
    %1014 = vmatpush.msra.mxu0 %v153
    %1015 = vmatpush.msra.mxu0 %v152
    %1016 = vmatpush.msra.mxu0 %v151
    %1017 = vmatpush.msra.mxu0 %v150
    %1018 = vmatpush.msra.mxu0 %v149
    %1019 = vmatpush.msra.mxu0 %v148
    %1020 = vmatmul.f32.gmra.mxu0 %v1002
    %v1021 = vpop.f32.mrf.mxu0
    %v1022 = vadd.f32 %v224, %v1021
    %1023 = vdwg.mxu0
    %v1024 = vxor.u32 %v1022, 2147483648
    %v1025 = vmul.f32 %v1024, 1.442695
    %v1026 = vpow.pop %v1025
    %v1027 = vadd.f32 %v1026, 1.0
    %v1028 = vrcp.pop %v1027
    %v1029 = vmul.f32 %v1027, %v1028
    %v1030 = vsub.f32 1.0, %v1029
    %v1031 = vmul.f32 %v1028, %v1030
    %v1032 = vadd.f32 %v1028, %v1031
    %vm1033 = vweird.f32 %v1027
    %vm1034 = vweird.f32 %v1028
    %vm1035 = vmor %vm1033, %vm1034
    %v1036 = vsel %vm1035, %v1028, %v1032
    %v1037 = vand.u32 2147483647, %v1027
    %vm1038 = vcmp.eq.f32.partialorder %v1037, 8.507059e+37
    %v1039 = vand.u32 %v1027, 2147483648
    %v1040 = vor.u32 1.1754944e-38, %v1039
    %v1041 = vsel %vm1038, %v1040, %v1036
    %v1042 = vmul.f32 1.0, %v1041
    %v1043 = vtanh.pop %v1022
    %v1044 = vmul.f32 %v1042, %v925
    %1046 = vrot.lane.b32.xlu0 %v1043, 64
    %v1047 = vpop.permute.xlu0 %1046
    %v1049 = vmul.f32 %v1042, %v1047
    %1051 = vrot.lane.b32.xlu0 %v1049, 32
    %v1052 = vpop.permute.xlu0 %1051
    %v1054 = vadd.f32 %v1044, %v1052
    %v1055 = vtanh.pop %v1054
    %1057 = vrot.lane.b32.xlu0 %v1055, 64
    %v1058 = vpop.permute.xlu0 %1057
    %v1060 = vmul.f32 %v1042, %v1058
    %v1061 = vsel %vm78, %v994, 0
    %1063 = vmatpush.msra.mxu0 0.0
    %1064 = vmatpush.msra.mxu0 0.0
    %1065 = vmatpush.msra.mxu0 0.0
    %1066 = vmatpush.msra.mxu0 0.0
    %1067 = vmatpush.msra.mxu0 0.0
    %1068 = vmatpush.msra.mxu0 0.0
    %1069 = vmatpush.msra.mxu0 0.0
    %1070 = vmatpush.msra.mxu0 0.0
    %1071 = vmatpush.msra.mxu0 0.0
    %1072 = vmatpush.msra.mxu0 0.0
    %1073 = vmatpush.msra.mxu0 0.0
    %1074 = vmatpush.msra.mxu0 0.0
    %1075 = vmatpush.msra.mxu0 %v147
    %1076 = vmatpush.msra.mxu0 %v146
    %1077 = vmatpush.msra.mxu0 %v145
    %1078 = vmatpush.msra.mxu0 %v144
    %1079 = vmatmul.f32.gmra.mxu0 %v1061
    %v1080 = vpop.f32.mrf.mxu0
    %v1081 = vadd.f32 0.0, %v1080
    %1082 = vdwg.mxu0
    %v1083 = vadd.f32 %v142, %v1081
    %v1084 = vxor.u32 %v1083, 2147483648
    %v1085 = vmul.f32 %v1084, 1.442695
    %v1086 = vpow.pop %v1085
    %v1087 = vadd.f32 %v1086, 1.0
    %v1088 = vrcp.pop %v1087
    %v1089 = vmul.f32 %v1087, %v1088
    %v1090 = vsub.f32 1.0, %v1089
    %v1091 = vmul.f32 %v1088, %v1090
    %v1092 = vadd.f32 %v1088, %v1091
    %vm1093 = vweird.f32 %v1087
    %vm1094 = vweird.f32 %v1088
    %vm1095 = vmor %vm1093, %vm1094
    %v1096 = vsel %vm1095, %v1088, %v1092
    %v1097 = vand.u32 2147483647, %v1087
    %vm1098 = vcmp.eq.f32.partialorder %v1097, 8.507059e+37
    %v1099 = vand.u32 %v1087, 2147483648
    %v1100 = vor.u32 1.1754944e-38, %v1099
    %v1101 = vsel %vm1098, %v1100, %v1096
    %v1102 = vmul.f32 1.0, %v1101
    %v1103 = vtanh.pop %v1083
    %v1104 = vmul.f32 %v1102, %v985
    %1106 = vrot.lane.b32.xlu0 %v1103, 64
    %v1107 = vpop.permute.xlu0 %1106
    %v1109 = vmul.f32 %v1102, %v1107
    %1111 = vrot.lane.b32.xlu0 %v1109, 32
    %v1112 = vpop.permute.xlu0 %1111
    %v1114 = vadd.f32 %v1104, %v1112
    %v1115 = vtanh.pop %v1114
    %1117 = vrot.lane.b32.xlu0 %v1115, 64
    %v1118 = vpop.permute.xlu0 %1117
    %v1120 = vmul.f32 %v1102, %v1118
    %1122 = vrot.lane.b32.xlu0 %v1120, 32
    %v1123 = vpop.permute.xlu0 %1122
    %1126 = vrot.lane.b32.xlu0 %v1060, 64
    %v1127 = vpop.permute.xlu0 %1126
    %v1129 = vsel %vm78, %v1123, %v1127
    %v1131 = vsel %vm226, %v1129, 0
    %1133 = vmatpush.msra.mxu0 0.0
    %1134 = vmatpush.msra.mxu0 0.0
    %1135 = vmatpush.msra.mxu0 0.0
    %1136 = vmatpush.msra.mxu0 0.0
    %1137 = vmatpush.msra.mxu0 0.0
    %1138 = vmatpush.msra.mxu0 0.0
    %1139 = vmatpush.msra.mxu0 0.0
    %1140 = vmatpush.msra.mxu0 0.0
    %1141 = vmatpush.msra.mxu0 %v155
    %1142 = vmatpush.msra.mxu0 %v154
    %1143 = vmatpush.msra.mxu0 %v153
    %1144 = vmatpush.msra.mxu0 %v152
    %1145 = vmatpush.msra.mxu0 %v151
    %1146 = vmatpush.msra.mxu0 %v150
    %1147 = vmatpush.msra.mxu0 %v149
    %1148 = vmatpush.msra.mxu0 %v148
    %1149 = vmatmul.f32.gmra.mxu0 %v1131
    %v1150 = vpop.f32.mrf.mxu0
    %v1151 = vadd.f32 %v224, %v1150
    %1152 = vdwg.mxu0
    %v1153 = vxor.u32 %v1151, 2147483648
    %v1154 = vmul.f32 %v1153, 1.442695
    %v1155 = vpow.pop %v1154
    %v1156 = vadd.f32 %v1155, 1.0
    %v1157 = vrcp.pop %v1156
    %v1158 = vmul.f32 %v1156, %v1157
    %v1159 = vsub.f32 1.0, %v1158
    %v1160 = vmul.f32 %v1157, %v1159
    %v1161 = vadd.f32 %v1157, %v1160
    %vm1162 = vweird.f32 %v1156
    %vm1163 = vweird.f32 %v1157
    %vm1164 = vmor %vm1162, %vm1163
    %v1165 = vsel %vm1164, %v1157, %v1161
    %v1166 = vand.u32 2147483647, %v1156
    %vm1167 = vcmp.eq.f32.partialorder %v1166, 8.507059e+37
    %v1168 = vand.u32 %v1156, 2147483648
    %v1169 = vor.u32 1.1754944e-38, %v1168
    %v1170 = vsel %vm1167, %v1169, %v1165
    %v1171 = vmul.f32 1.0, %v1170
    %v1172 = vtanh.pop %v1151
    %v1173 = vmul.f32 %v1171, %v1054
    %1175 = vrot.lane.b32.xlu0 %v1172, 64
    %v1176 = vpop.permute.xlu0 %1175
    %v1178 = vmul.f32 %v1171, %v1176
    %1180 = vrot.lane.b32.xlu0 %v1178, 32
    %v1181 = vpop.permute.xlu0 %1180
    %v1183 = vadd.f32 %v1173, %v1181
    %v1184 = vtanh.pop %v1183
    %1186 = vrot.lane.b32.xlu0 %v1184, 64
    %v1187 = vpop.permute.xlu0 %1186
    %v1189 = vmul.f32 %v1171, %v1187
    %v1190 = vld [vmem:[#allocation5] sm:$0xff]
    %v1191 = vld [vmem:[#allocation5 + $0x8] sm:$0xff]
    %v1192 = vld [vmem:[#allocation5 + $0x10] sm:$0xff]
    %v1193 = vld [vmem:[#allocation5 + $0x18] sm:$0xff]
    %v1194 = vld [vmem:[%s7] sm:$0x1]
    %v1196 = vperm.slane %v1194, 0
    %1199 = vrot.lane.b32.xlu0 %v286, 32
    %v1200 = vpop.permute.xlu0 %1199
    %1201 = vrot.lane.b32.xlu0 %v415, 32
    %v1202 = vpop.permute.xlu0 %1201
    %1203 = vrot.lane.b32.xlu0 %v544, 32
    %v1204 = vpop.permute.xlu0 %1203
    %1205 = vrot.lane.b32.xlu0 %v673, 32
    %v1206 = vpop.permute.xlu0 %1205
    %1207 = vrot.lane.b32.xlu0 %v802, 32
    %v1208 = vpop.permute.xlu0 %1207
    %1209 = vrot.lane.b32.xlu0 %v931, 32
    %v1210 = vpop.permute.xlu0 %1209
    %1211 = vrot.lane.b32.xlu0 %v1060, 32
    %v1212 = vpop.permute.xlu0 %1211
    %1213 = vrot.lane.b32.xlu0 %v1189, 32
    %v1214 = vpop.permute.xlu0 %1213
    %v1215 = vsel %vm78, %v1200, 0
    %v1217 = vsel %vm78, %v1202, 0
    %v1219 = vsel %vm78, %v1204, 0
    %v1221 = vsel %vm78, %v1206, 0
    %v1223 = vsel %vm78, %v1208, 0
    %v1225 = vsel %vm78, %v1210, 0
    %v1227 = vsel %vm78, %v1212, 0
    %v1229 = vsel %vm78, %v1214, 0
    %1231 = vmatpush.msra.mxu0 0.0
    %1232 = vmatpush.msra.mxu0 0.0
    %1233 = vmatpush.msra.mxu0 0.0
    %1234 = vmatpush.msra.mxu0 0.0
    %1235 = vmatpush.msra.mxu0 0.0
    %1236 = vmatpush.msra.mxu0 0.0
    %1237 = vmatpush.msra.mxu0 0.0
    %1238 = vmatpush.msra.mxu0 0.0
    %1239 = vmatpush.msra.mxu0 0.0
    %1240 = vmatpush.msra.mxu0 0.0
    %1241 = vmatpush.msra.mxu0 0.0
    %1242 = vmatpush.msra.mxu0 0.0
    %1243 = vmatpush.msra.mxu0 %v1193
    %1244 = vmatpush.msra.mxu0 %v1192
    %1245 = vmatpush.msra.mxu0 %v1191
    %1246 = vmatpush.msra.mxu0 %v1190
    %1247 = vmatmul.f32.gmra.mxu0 %v1215
    %v1248 = vpop.f32.mrf.mxu0
    %v1249 = vadd.f32 %v1196, %v1248
    %1250 = vmatmul.f32.gmra.mxu0 %v1217
    %v1251 = vpop.f32.mrf.mxu0
    %v1252 = vadd.f32 %v1196, %v1251
    %1253 = vmatmul.f32.gmra.mxu0 %v1219
    %v1254 = vpop.f32.mrf.mxu0
    %v1255 = vadd.f32 %v1196, %v1254
    %1256 = vmatmul.f32.gmra.mxu0 %v1221
    %v1257 = vpop.f32.mrf.mxu0
    %v1258 = vadd.f32 %v1196, %v1257
    %1259 = vmatmul.f32.gmra.mxu0 %v1223
    %v1260 = vpop.f32.mrf.mxu0
    %v1261 = vadd.f32 %v1196, %v1260
    %1262 = vmatmul.f32.gmra.mxu0 %v1225
    %v1263 = vpop.f32.mrf.mxu0
    %v1264 = vadd.f32 %v1196, %v1263
    %1265 = vmatmul.f32.gmra.mxu0 %v1227
    %v1266 = vpop.f32.mrf.mxu0
    %v1267 = vadd.f32 %v1196, %v1266
    %1268 = vmatmul.f32.gmra.mxu0 %v1229
    %v1269 = vpop.f32.mrf.mxu0
    %v1270 = vadd.f32 %v1196, %v1269
    %1271 = vdwg.mxu0
    %1272 = vst [vmem:[#allocation7] sm:$0xff] %v1249
    %1273 = vst [vmem:[#allocation7 + $0x8] sm:$0xff] %v1252
    %1274 = vst [vmem:[#allocation7 + $0x10] sm:$0xff] %v1255
    %1275 = vst [vmem:[#allocation7 + $0x18] sm:$0xff] %v1258
    %1276 = vst [vmem:[#allocation7 + $0x20] sm:$0xff] %v1261
    %1277 = vst [vmem:[#allocation7 + $0x28] sm:$0xff] %v1264
    %1278 = vst [vmem:[#allocation7 + $0x30] sm:$0xff] %v1267
    %1279 = vst [vmem:[#allocation7 + $0x38] sm:$0xff] %v1270
    // Predicated region
    $region42: #{tpu_custom_call.1} parent=1 // pred_check
      _
    $region43: #{tpu_custom_call.1} parent=1 // pred_check_branch
      %1281 = sbr.rel (0) target = $region45
    $region44: #{tpu_custom_call.1} parent=1 // pred_region
      %1283 = vsyncadd [#allocation4], 0
      %s1284 = sshll.u32 [#allocation7], 4
      %s1285 = int_to_ptr.vmem [resolvable:$true] %s1284
      %s1286 = sshll.u32 %s8, 4
      %s1287 = int_to_ptr.hbm [resolvable:$true] %s1286
      %1292 = dma.vmem_to_hbm [thread:$0]  %s1285, 1024, %s1287, [#allocation4], 128, 128, 8
    $region45: #{tpu_custom_call.1} parent=1 // pred_fallthru
      _
    // Predicated region
    $region46: #{tpu_custom_call.1} parent=1 // pred_check
      _
    $region47: #{tpu_custom_call.1} parent=1 // pred_check_branch
      %1294 = sbr.rel (0) target = $region49
    $region48: #{tpu_custom_call.1} parent=1 // pred_region
      %1296 = dma.done [#allocation4], 1024
    $region49: #{tpu_custom_call.1} parent=1 // pred_fallthru
      _
    %1297 = vsyncpa [#allocation3], 1
    %1298 = vsyncpa [#allocation6], 1
    %1299 = vsyncpa [#allocation4], 1

</llo_original>
